<compile_context>
chip_gen: v7x
topology: tpu7x:2x2x1
jax: 0.10.0
libtpu: 0.0.40
codegen_flags: <defaults>
</compile_context>

<pallas_src>
import functools
import math

import jax
import jax.numpy as jnp
from jax import lax
from jax.experimental import pallas as pl
from jax.experimental.pallas import tpu as pltpu

GF_EPS = 1e-8


# --------------------- kernel 1: feature_ext (1x1-conv MLP) ------------------
def _feat_kernel(img_ref, w1_ref, b1_ref, w2_ref, b2_ref, o_ref):
    # img: [Cin_pad, tm]  w1: [Ch, Cin_pad]  b1: [Ch, 1]  w2: [1, Ch]  b2: [1, 1]
    h = jnp.dot(w1_ref[...], img_ref[...], preferred_element_type=jnp.float32)
    h = jnp.maximum(h + b1_ref[...], 0.0)
    o_ref[...] = (jnp.dot(w2_ref[...], h, preferred_element_type=jnp.float32)
                  + b2_ref[...])


def _pick_m_tile(m):
    if m % 128 != 0:
        return m                        # awkward M: single resident block
    for t in (4096, 2048, 1024, 512, 256, 128):
        if m % t == 0:
            return t
    return m


def feature_ext_pallas(img_flat, w1, b1, w2, b2):
    """img_flat: [Cin, M] (M = N*H*W on lanes) -> feat [1, M]."""
    cin, m = img_flat.shape
    ch = w1.shape[0]
    pad_c = (-cin) % 8                  # sublane-align the contraction dim
    if pad_c:
        img_flat = jnp.pad(img_flat, ((0, pad_c), (0, 0)))
        w1 = jnp.pad(w1, ((0, 0), (0, pad_c)))
    cin_p = cin + pad_c
    tm = _pick_m_tile(m)
    full = lambda i: (0, 0)
    return pl.pallas_call(
        _feat_kernel,
        out_shape=jax.ShapeDtypeStruct((1, m), jnp.float32),
        grid=(m // tm,),
        in_specs=[pl.BlockSpec((cin_p, tm), lambda i: (0, i)),
                  pl.BlockSpec((ch, cin_p), full),
                  pl.BlockSpec((ch, 1), full),
                  pl.BlockSpec((1, ch), full),
                  pl.BlockSpec((1, 1), full)],
        out_specs=pl.BlockSpec((1, tm), lambda i: (0, i)),
        compiler_params=pltpu.CompilerParams(dimension_semantics=("parallel",)),
    )(img_flat, w1, b1, w2, b2)


# ----------- kernel 2: bilinear upsample + guided filter, fully fused --------
def _gf_kernel(feat_ref, dmap_ref, ah_ref, awt_ref, o_ref, *, eps):
    x = feat_ref[0]                                    # [H, W]   guide plane
    d = dmap_ref[0]                                    # [Hd, Wd] low-res depth

    # bilinear upsample (align_corners=True): y = A_h @ d @ A_w^T   (MXU)
    t = jnp.dot(d, awt_ref[...], preferred_element_type=jnp.float32)
    y = jnp.dot(ah_ref[...], t, preferred_element_type=jnp.float32)   # [H, W]

    H, W = x.shape
    ri = lax.broadcasted_iota(jnp.int32, (H, W), 0)
    ci = lax.broadcasted_iota(jnp.int32, (H, W), 1)

    def box3(v):
        # separable 3x3 box sum with zero padding (== DGF cumsum BoxFilter, r=1)
        up = jnp.where(ri >= 1, pltpu.roll(v, shift=1, axis=0), 0.0)
        dn = jnp.where(ri <= H - 2, pltpu.roll(v, shift=H - 1, axis=0), 0.0)
        s = v + up + dn
        lf = jnp.where(ci >= 1, pltpu.roll(s, shift=1, axis=1), 0.0)
        rt = jnp.where(ci <= W - 2, pltpu.roll(s, shift=W - 1, axis=1), 0.0)
        return s + lf + rt

    inv_n = 1.0 / box3(jnp.ones((H, W), jnp.float32))   # per-pixel window count
    mean_x = box3(x) * inv_n
    mean_y = box3(y) * inv_n
    cov_xy = box3(x * y) * inv_n - mean_x * mean_y
    var_x = box3(x * x) * inv_n - mean_x * mean_x
    A = cov_xy / (var_x + eps)
    b = mean_y - A * mean_x
    mean_A = box3(A) * inv_n
    mean_b = box3(b) * inv_n
    o_ref[0] = mean_A * x + mean_b


def guided_filter_pallas(feat, dmap_lr, a_h, a_wt, eps=GF_EPS):
    """feat: [N,H,W] guide; dmap_lr: [N,Hd,Wd]; returns refined [N,H,W]."""
    n, h, w = feat.shape
    _, hd, wd = dmap_lr.shape
    full = lambda i: (0, 0)
    return pl.pallas_call(
        functools.partial(_gf_kernel, eps=eps),
        out_shape=jax.ShapeDtypeStruct((n, h, w), jnp.float32),
        grid=(n,),
        in_specs=[pl.BlockSpec((1, h, w), lambda i: (i, 0, 0)),
                  pl.BlockSpec((1, hd, wd), lambda i: (i, 0, 0)),
                  pl.BlockSpec((h, hd), full),
                  pl.BlockSpec((wd, w), full)],
        out_specs=pl.BlockSpec((1, h, w), lambda i: (i, 0, 0)),
        compiler_params=pltpu.CompilerParams(dimension_semantics=("parallel",)),
    )(feat, dmap_lr, a_h, a_wt)


# ------------------------------ JAX-level glue --------------------------------
def _bilinear_matrix(out_size, in_size):
    """[out_size, in_size] interpolation weights, F.interpolate align_corners=True."""
    scale = 0.0 if out_size == 1 else (in_size - 1) / (out_size - 1)
    src = jnp.arange(out_size, dtype=jnp.float32) * scale
    i0 = jnp.clip(jnp.floor(src).astype(jnp.int32), 0, max(in_size - 2, 0))
    frac = src - i0.astype(jnp.float32)
    rows = jnp.arange(out_size)
    a = jnp.zeros((out_size, in_size), jnp.float32)
    a = a.at[rows, i0].add(1.0 - frac)
    a = a.at[rows, jnp.minimum(i0 + 1, in_size - 1)].add(frac)
    return a


def refine_dgf_forward(params, dmap, img_guide):
    """dmap: [N,1,Hd,Wd], img_guide: [N,3,H,W] (NCHW). Returns [N,1,H,W]."""
    n, c, h, w = img_guide.shape
    nd, cd, hd, wd = dmap.shape
    assert nd == n and cd == 1, "input format is wrong"
    rh, rw = h // hd, w // wd
    assert rh == rw, "aspect ratio should correspond"
    assert rh > 1, "guided image resolution should > depth res."

    # feature_ext: fused pointwise MLP on a lane-dense [Cin, N*H*W] layout
    img_flat = jnp.transpose(img_guide, (1, 0, 2, 3)).reshape(c, n * h * w)
    feat = feature_ext_pallas(img_flat, params["w1"], params["b1"],
                              params["w2"], params["b2"])
    feat = feat.reshape(n, h, w)

    # fused bilinear upsample + guided filter (one kernel, grid over batch)
    a_h = _bilinear_matrix(h, hd)
    a_wt = _bilinear_matrix(w, wd).T
    out = guided_filter_pallas(feat, dmap.reshape(n, hd, wd), a_h, a_wt)
    return out.reshape(n, 1, h, w)


# --------------------------------- demo ---------------------------------------
if __name__ == "__main__":
    key = jax.random.PRNGKey(0)
    k_img, k_d, k_w1, k_b1, k_w2, k_b2 = jax.random.split(key, 6)

    N, C, H, W = 2, 3, 16, 16          # in_channels = 3 (feature_ext expects 3)
    Hd, Wd = 8, 8                      # up_ratio = 2 (> 1 as the module asserts)

    img_guide = jax.random.normal(k_img, (N, C, H, W), jnp.float32)
    dmap = jax.random.normal(k_d, (N, 1, Hd, Wd), jnp.float32)

    # Conv2d weight init per weight_init(): normal(0, sqrt(2/n)), n = kh*kw*Cout;
    # biases use PyTorch's default uniform(+-1/sqrt(fan_in)).
    params = {
        "w1": jax.random.normal(k_w1, (64, C), jnp.float32) * math.sqrt(2.0 / 64.0),
        "b1": jax.random.uniform(k_b1, (64, 1), jnp.float32,
                                 -1.0 / math.sqrt(C), 1.0 / math.sqrt(C)),
        "w2": jax.random.normal(k_w2, (1, 64), jnp.float32) * math.sqrt(2.0),
        "b2": jax.random.uniform(k_b2, (1, 1), jnp.float32,
                                 -1.0 / math.sqrt(64.0), 1.0 / math.sqrt(64.0)),
    }

    fwd = jax.jit(refine_dgf_forward)
    out = jax.block_until_ready(fwd(params, dmap, img_guide))
    assert out.shape == (N, 1, H, W), out.shape
    assert bool(jnp.all(jnp.isfinite(out)))
    print("KERNEL_OK")
</pallas_src>

<mosaic_0001>
module attributes {stable_mosaic.version = 11 : i64} {
  func.func private @main(%arg0: i32) attributes {dimension_semantics = [#tpu.dimension_semantics<core_parallel>], iteration_bounds = array<i64: 2>, tpu.core_type = #tpu.core_type<sc_scalar_subcore>, window_params = []} {
    return
  }
}

module attributes {stable_mosaic.version = 11 : i64} {
  func.func private @main(%arg0: i32) attributes {dimension_semantics = [#tpu.dimension_semantics<core_parallel>], iteration_bounds = array<i64: 2>, tpu.core_type = #tpu.core_type<sc_scalar_subcore>, window_params = []} {
    return
  }
}

module attributes {stable_mosaic.version = 11 : i64} {
  func.func @_feat_kernel(%arg0: i32, %arg1: memref<8x512xf32, #tpu.memory_space<vmem>>, %arg2: memref<64x8xf32, #tpu.memory_space<vmem>>, %arg3: memref<64x1xf32, #tpu.memory_space<vmem>>, %arg4: memref<1x64xf32, #tpu.memory_space<vmem>>, %arg5: memref<1x1xf32, #tpu.memory_space<vmem>>, %arg6: memref<1x512xf32, #tpu.memory_space<vmem>>) attributes {dimension_semantics = [#tpu.dimension_semantics<parallel>], iteration_bounds = array<i64: 1>, scalar_prefetch = 0 : i64, scratch_operands = 0 : i64, tpu.core_type = #tpu.core_type<tc>, window_params = [{transform_indices = @transform_0, window_bounds = array<i64: 8, 512>}, {pipeline_mode = #tpu.pipeline_mode<synchronous>, transform_indices = @transform_1, window_bounds = array<i64: 64, 8>}, {pipeline_mode = #tpu.pipeline_mode<synchronous>, transform_indices = @transform_2, window_bounds = array<i64: 64, 1>}, {pipeline_mode = #tpu.pipeline_mode<synchronous>, transform_indices = @transform_3, window_bounds = array<i64: 1, 64>}, {pipeline_mode = #tpu.pipeline_mode<synchronous>, transform_indices = @transform_4, window_bounds = array<i64: 1, 1>}, {transform_indices = @transform_5, window_bounds = array<i64: 1, 512>}]} {
    %c0 = arith.constant 0 : index
    %c0_0 = arith.constant 0 : index
    %0 = vector.load %arg2[%c0, %c0_0] : memref<64x8xf32, #tpu.memory_space<vmem>>, vector<64x8xf32>
    %c0_1 = arith.constant 0 : index
    %c0_2 = arith.constant 0 : index
    %1 = vector.load %arg1[%c0_1, %c0_2] : memref<8x512xf32, #tpu.memory_space<vmem>>, vector<8x512xf32>
    %cst = arith.constant dense<0.000000e+00> : vector<64x512xf32>
    %2 = tpu.matmul %0, %1, %cst {dimension_numbers = #tpu.dot_dimension_numbers<[1], [0], [0], [1], [0, 0, 1, 1], [], []>} : vector<64x8xf32>, vector<8x512xf32>, vector<64x512xf32> -> vector<64x512xf32>
    %c0_3 = arith.constant 0 : index
    %c0_4 = arith.constant 0 : index
    %3 = vector.load %arg3[%c0_3, %c0_4] : memref<64x1xf32, #tpu.memory_space<vmem>>, vector<64x1xf32>
    %4 = vector.broadcast %3 : vector<64x1xf32> to vector<64x512xf32>
    %5 = arith.addf %2, %4 : vector<64x512xf32>
    %cst_5 = arith.constant 0.000000e+00 : f32
    %6 = vector.broadcast %cst_5 : f32 to vector<64x512xf32>
    %7 = arith.maximumf %5, %6 : vector<64x512xf32>
    %c0_6 = arith.constant 0 : index
    %c0_7 = arith.constant 0 : index
    %8 = vector.load %arg4[%c0_6, %c0_7] : memref<1x64xf32, #tpu.memory_space<vmem>>, vector<1x64xf32>
    %cst_8 = arith.constant dense<0.000000e+00> : vector<1x512xf32>
    %9 = tpu.matmul %8, %7, %cst_8 {dimension_numbers = #tpu.dot_dimension_numbers<[1], [0], [0], [1], [0, 0, 1, 1], [], []>} : vector<1x64xf32>, vector<64x512xf32>, vector<1x512xf32> -> vector<1x512xf32>
    %c0_9 = arith.constant 0 : index
    %c0_10 = arith.constant 0 : index
    %10 = vector.load %arg5[%c0_9, %c0_10] : memref<1x1xf32, #tpu.memory_space<vmem>>, vector<1x1xf32>
    %11 = vector.broadcast %10 : vector<1x1xf32> to vector<1x512xf32>
    %12 = arith.addf %9, %11 : vector<1x512xf32>
    %c0_11 = arith.constant 0 : index
    %c0_12 = arith.constant 0 : index
    %13 = vector.load %arg6[%c0_11, %c0_12] : memref<1x512xf32, #tpu.memory_space<vmem>>, vector<1x512xf32>
    tpu.vector_store %arg6[%c0_11, %c0_12], %12 {strides = array<i32>} : memref<1x512xf32, #tpu.memory_space<vmem>>, vector<1x512xf32>,
    return
  }
  func.func @transform_0(%arg0: i32) -> (i32, i32) {
    %c0_i32 = arith.constant 0 : i32
    %c0_i32_0 = arith.constant 0 : i32
    return %c0_i32, %arg0 : i32, i32
  }
  func.func @transform_1(%arg0: i32) -> (i32, i32) {
    %c0_i32 = arith.constant 0 : i32
    %c0_i32_0 = arith.constant 0 : i32
    %c0_i32_1 = arith.constant 0 : i32
    return %c0_i32, %c0_i32_0 : i32, i32
  }
  func.func @transform_2(%arg0: i32) -> (i32, i32) {
    %c0_i32 = arith.constant 0 : i32
    %c0_i32_0 = arith.constant 0 : i32
    %c0_i32_1 = arith.constant 0 : i32
    return %c0_i32, %c0_i32_0 : i32, i32
  }
  func.func @transform_3(%arg0: i32) -> (i32, i32) {
    %c0_i32 = arith.constant 0 : i32
    %c0_i32_0 = arith.constant 0 : i32
    %c0_i32_1 = arith.constant 0 : i32
    return %c0_i32, %c0_i32_0 : i32, i32
  }
  func.func @transform_4(%arg0: i32) -> (i32, i32) {
    %c0_i32 = arith.constant 0 : i32
    %c0_i32_0 = arith.constant 0 : i32
    %c0_i32_1 = arith.constant 0 : i32
    return %c0_i32, %c0_i32_0 : i32, i32
  }
  func.func @transform_5(%arg0: i32) -> (i32, i32) {
    %c0_i32 = arith.constant 0 : i32
    %c0_i32_0 = arith.constant 0 : i32
    return %c0_i32, %arg0 : i32, i32
  }
}

module attributes {stable_mosaic.version = 11 : i64} {
  func.func @_gf_kernel(%arg0: i32, %arg1: memref<1x16x16xf32, #tpu.memory_space<vmem>>, %arg2: memref<1x8x8xf32, #tpu.memory_space<vmem>>, %arg3: memref<16x8xf32, #tpu.memory_space<vmem>>, %arg4: memref<8x16xf32, #tpu.memory_space<vmem>>, %arg5: memref<1x16x16xf32, #tpu.memory_space<vmem>>) attributes {dimension_semantics = [#tpu.dimension_semantics<parallel>], iteration_bounds = array<i64: 2>, scalar_prefetch = 0 : i64, scratch_operands = 0 : i64, tpu.core_type = #tpu.core_type<tc>, window_params = [{transform_indices = @transform_0, window_bounds = array<i64: 1, 16, 16>}, {transform_indices = @transform_1, window_bounds = array<i64: 1, 8, 8>}, {pipeline_mode = #tpu.pipeline_mode<synchronous>, transform_indices = @transform_2, window_bounds = array<i64: 16, 8>}, {pipeline_mode = #tpu.pipeline_mode<synchronous>, transform_indices = @transform_3, window_bounds = array<i64: 8, 16>}, {transform_indices = @transform_4, window_bounds = array<i64: 1, 16, 16>}]} {
    %c0 = arith.constant 0 : index
    %c0_0 = arith.constant 0 : index
    %c0_1 = arith.constant 0 : index
    %0 = vector.load %arg1[%c0, %c0_0, %c0_1] : memref<1x16x16xf32, #tpu.memory_space<vmem>>, vector<1x16x16xf32>
    %1 = vector.shape_cast %0 : vector<1x16x16xf32> to vector<16x16xf32>
    %c0_2 = arith.constant 0 : index
    %c0_3 = arith.constant 0 : index
    %c0_4 = arith.constant 0 : index
    %2 = vector.load %arg2[%c0_2, %c0_3, %c0_4] : memref<1x8x8xf32, #tpu.memory_space<vmem>>, vector<1x8x8xf32>
    %3 = vector.shape_cast %2 : vector<1x8x8xf32> to vector<8x8xf32>
    %c0_5 = arith.constant 0 : index
    %c0_6 = arith.constant 0 : index
    %4 = vector.load %arg4[%c0_5, %c0_6] : memref<8x16xf32, #tpu.memory_space<vmem>>, vector<8x16xf32>
    %cst = arith.constant dense<0.000000e+00> : vector<8x16xf32>
    %5 = tpu.matmul %3, %4, %cst {dimension_numbers = #tpu.dot_dimension_numbers<[1], [0], [0], [1], [0, 0, 1, 1], [], []>} : vector<8x8xf32>, vector<8x16xf32>, vector<8x16xf32> -> vector<8x16xf32>
    %c0_7 = arith.constant 0 : index
    %c0_8 = arith.constant 0 : index
    %6 = vector.load %arg3[%c0_7, %c0_8] : memref<16x8xf32, #tpu.memory_space<vmem>>, vector<16x8xf32>
    %cst_9 = arith.constant dense<0.000000e+00> : vector<16x16xf32>
    %7 = tpu.matmul %6, %5, %cst_9 {dimension_numbers = #tpu.dot_dimension_numbers<[1], [0], [0], [1], [0, 0, 1, 1], [], []>} : vector<16x8xf32>, vector<8x16xf32>, vector<16x16xf32> -> vector<16x16xf32>
    %8 = tpu.iota {dimensions = array<i32: 0>} : vector<16x16xi32>
    %9 = tpu.iota {dimensions = array<i32: 1>} : vector<16x16xi32>
    %cst_10 = arith.constant 1.000000e+00 : f32
    %10 = vector.broadcast %cst_10 : f32 to vector<16x16xf32>
    %c1_i32 = arith.constant 1 : i32
    %11 = vector.broadcast %c1_i32 : i32 to vector<16x16xi32>
    %12 = arith.cmpi sge, %8, %11 : vector<16x16xi32>
    %c1_i32_11 = arith.constant 1 : i32
    %13 = tpu.dynamic_rotate %10 by %c1_i32_11 dim 0 : vector<16x16xf32>, i32 -> vector<16x16xf32>
    %cst_12 = arith.constant 0.000000e+00 : f32
    %14 = vector.broadcast %cst_12 : f32 to vector<16x16xf32>
    %15 = arith.select %12, %13, %14 : vector<16x16xi1>, vector<16x16xf32>
    %c14_i32 = arith.constant 14 : i32
    %16 = vector.broadcast %c14_i32 : i32 to vector<16x16xi32>
    %17 = arith.cmpi sle, %8, %16 : vector<16x16xi32>
    %c15_i32 = arith.constant 15 : i32
    %18 = tpu.dynamic_rotate %10 by %c15_i32 dim 0 : vector<16x16xf32>, i32 -> vector<16x16xf32>
    %cst_13 = arith.constant 0.000000e+00 : f32
    %19 = vector.broadcast %cst_13 : f32 to vector<16x16xf32>
    %20 = arith.select %17, %18, %19 : vector<16x16xi1>, vector<16x16xf32>
    %21 = arith.addf %10, %15 : vector<16x16xf32>
    %22 = arith.addf %21, %20 : vector<16x16xf32>
    %c1_i32_14 = arith.constant 1 : i32
    %23 = vector.broadcast %c1_i32_14 : i32 to vector<16x16xi32>
    %24 = arith.cmpi sge, %9, %23 : vector<16x16xi32>
    %c1_i32_15 = arith.constant 1 : i32
    %25 = tpu.dynamic_rotate %22 by %c1_i32_15 dim 1 : vector<16x16xf32>, i32 -> vector<16x16xf32>
    %cst_16 = arith.constant 0.000000e+00 : f32
    %26 = vector.broadcast %cst_16 : f32 to vector<16x16xf32>
    %27 = arith.select %24, %25, %26 : vector<16x16xi1>, vector<16x16xf32>
    %c14_i32_17 = arith.constant 14 : i32
    %28 = vector.broadcast %c14_i32_17 : i32 to vector<16x16xi32>
    %29 = arith.cmpi sle, %9, %28 : vector<16x16xi32>
    %c15_i32_18 = arith.constant 15 : i32
    %30 = tpu.dynamic_rotate %22 by %c15_i32_18 dim 1 : vector<16x16xf32>, i32 -> vector<16x16xf32>
    %cst_19 = arith.constant 0.000000e+00 : f32
    %31 = vector.broadcast %cst_19 : f32 to vector<16x16xf32>
    %32 = arith.select %29, %30, %31 : vector<16x16xi1>, vector<16x16xf32>
    %33 = arith.addf %22, %27 : vector<16x16xf32>
    %34 = arith.addf %33, %32 : vector<16x16xf32>
    %cst_20 = arith.constant 1.000000e+00 : f32
    %35 = vector.broadcast %cst_20 : f32 to vector<16x16xf32>
    %36 = arith.divf %35, %34 : vector<16x16xf32>
    %c1_i32_21 = arith.constant 1 : i32
    %37 = vector.broadcast %c1_i32_21 : i32 to vector<16x16xi32>
    %38 = arith.cmpi sge, %8, %37 : vector<16x16xi32>
    %c1_i32_22 = arith.constant 1 : i32
    %39 = tpu.dynamic_rotate %1 by %c1_i32_22 dim 0 : vector<16x16xf32>, i32 -> vector<16x16xf32>
    %cst_23 = arith.constant 0.000000e+00 : f32
    %40 = vector.broadcast %cst_23 : f32 to vector<16x16xf32>
    %41 = arith.select %38, %39, %40 : vector<16x16xi1>, vector<16x16xf32>
    %c14_i32_24 = arith.constant 14 : i32
    %42 = vector.broadcast %c14_i32_24 : i32 to vector<16x16xi32>
    %43 = arith.cmpi sle, %8, %42 : vector<16x16xi32>
    %c15_i32_25 = arith.constant 15 : i32
    %44 = tpu.dynamic_rotate %1 by %c15_i32_25 dim 0 : vector<16x16xf32>, i32 -> vector<16x16xf32>
    %cst_26 = arith.constant 0.000000e+00 : f32
    %45 = vector.broadcast %cst_26 : f32 to vector<16x16xf32>
    %46 = arith.select %43, %44, %45 : vector<16x16xi1>, vector<16x16xf32>
    %47 = arith.addf %1, %41 : vector<16x16xf32>
    %48 = arith.addf %47, %46 : vector<16x16xf32>
    %c1_i32_27 = arith.constant 1 : i32
    %49 = vector.broadcast %c1_i32_27 : i32 to vector<16x16xi32>
    %50 = arith.cmpi sge, %9, %49 : vector<16x16xi32>
    %c1_i32_28 = arith.constant 1 : i32
    %51 = tpu.dynamic_rotate %48 by %c1_i32_28 dim 1 : vector<16x16xf32>, i32 -> vector<16x16xf32>
    %cst_29 = arith.constant 0.000000e+00 : f32
    %52 = vector.broadcast %cst_29 : f32 to vector<16x16xf32>
    %53 = arith.select %50, %51, %52 : vector<16x16xi1>, vector<16x16xf32>
    %c14_i32_30 = arith.constant 14 : i32
    %54 = vector.broadcast %c14_i32_30 : i32 to vector<16x16xi32>
    %55 = arith.cmpi sle, %9, %54 : vector<16x16xi32>
    %c15_i32_31 = arith.constant 15 : i32
    %56 = tpu.dynamic_rotate %48 by %c15_i32_31 dim 1 : vector<16x16xf32>, i32 -> vector<16x16xf32>
    %cst_32 = arith.constant 0.000000e+00 : f32
    %57 = vector.broadcast %cst_32 : f32 to vector<16x16xf32>
    %58 = arith.select %55, %56, %57 : vector<16x16xi1>, vector<16x16xf32>
    %59 = arith.addf %48, %53 : vector<16x16xf32>
    %60 = arith.addf %59, %58 : vector<16x16xf32>
    %61 = arith.mulf %60, %36 : vector<16x16xf32>
    %c1_i32_33 = arith.constant 1 : i32
    %62 = vector.broadcast %c1_i32_33 : i32 to vector<16x16xi32>
    %63 = arith.cmpi sge, %8, %62 : vector<16x16xi32>
    %c1_i32_34 = arith.constant 1 : i32
    %64 = tpu.dynamic_rotate %7 by %c1_i32_34 dim 0 : vector<16x16xf32>, i32 -> vector<16x16xf32>
    %cst_35 = arith.constant 0.000000e+00 : f32
    %65 = vector.broadcast %cst_35 : f32 to vector<16x16xf32>
    %66 = arith.select %63, %64, %65 : vector<16x16xi1>, vector<16x16xf32>
    %c14_i32_36 = arith.constant 14 : i32
    %67 = vector.broadcast %c14_i32_36 : i32 to vector<16x16xi32>
    %68 = arith.cmpi sle, %8, %67 : vector<16x16xi32>
    %c15_i32_37 = arith.constant 15 : i32
    %69 = tpu.dynamic_rotate %7 by %c15_i32_37 dim 0 : vector<16x16xf32>, i32 -> vector<16x16xf32>
    %cst_38 = arith.constant 0.000000e+00 : f32
    %70 = vector.broadcast %cst_38 : f32 to vector<16x16xf32>
    %71 = arith.select %68, %69, %70 : vector<16x16xi1>, vector<16x16xf32>
    %72 = arith.addf %7, %66 : vector<16x16xf32>
    %73 = arith.addf %72, %71 : vector<16x16xf32>
    %c1_i32_39 = arith.constant 1 : i32
    %74 = vector.broadcast %c1_i32_39 : i32 to vector<16x16xi32>
    %75 = arith.cmpi sge, %9, %74 : vector<16x16xi32>
    %c1_i32_40 = arith.constant 1 : i32
    %76 = tpu.dynamic_rotate %73 by %c1_i32_40 dim 1 : vector<16x16xf32>, i32 -> vector<16x16xf32>
    %cst_41 = arith.constant 0.000000e+00 : f32
    %77 = vector.broadcast %cst_41 : f32 to vector<16x16xf32>
    %78 = arith.select %75, %76, %77 : vector<16x16xi1>, vector<16x16xf32>
    %c14_i32_42 = arith.constant 14 : i32
    %79 = vector.broadcast %c14_i32_42 : i32 to vector<16x16xi32>
    %80 = arith.cmpi sle, %9, %79 : vector<16x16xi32>
    %c15_i32_43 = arith.constant 15 : i32
    %81 = tpu.dynamic_rotate %73 by %c15_i32_43 dim 1 : vector<16x16xf32>, i32 -> vector<16x16xf32>
    %cst_44 = arith.constant 0.000000e+00 : f32
    %82 = vector.broadcast %cst_44 : f32 to vector<16x16xf32>
    %83 = arith.select %80, %81, %82 : vector<16x16xi1>, vector<16x16xf32>
    %84 = arith.addf %73, %78 : vector<16x16xf32>
    %85 = arith.addf %84, %83 : vector<16x16xf32>
    %86 = arith.mulf %85, %36 : vector<16x16xf32>
    %87 = arith.mulf %1, %7 : vector<16x16xf32>
    %c1_i32_45 = arith.constant 1 : i32
    %88 = vector.broadcast %c1_i32_45 : i32 to vector<16x16xi32>
    %89 = arith.cmpi sge, %8, %88 : vector<16x16xi32>
    %c1_i32_46 = arith.constant 1 : i32
    %90 = tpu.dynamic_rotate %87 by %c1_i32_46 dim 0 : vector<16x16xf32>, i32 -> vector<16x16xf32>
    %cst_47 = arith.constant 0.000000e+00 : f32
    %91 = vector.broadcast %cst_47 : f32 to vector<16x16xf32>
    %92 = arith.select %89, %90, %91 : vector<16x16xi1>, vector<16x16xf32>
    %c14_i32_48 = arith.constant 14 : i32
    %93 = vector.broadcast %c14_i32_48 : i32 to vector<16x16xi32>
    %94 = arith.cmpi sle, %8, %93 : vector<16x16xi32>
    %c15_i32_49 = arith.constant 15 : i32
    %95 = tpu.dynamic_rotate %87 by %c15_i32_49 dim 0 : vector<16x16xf32>, i32 -> vector<16x16xf32>
    %cst_50 = arith.constant 0.000000e+00 : f32
    %96 = vector.broadcast %cst_50 : f32 to vector<16x16xf32>
    %97 = arith.select %94, %95, %96 : vector<16x16xi1>, vector<16x16xf32>
    %98 = arith.addf %87, %92 : vector<16x16xf32>
    %99 = arith.addf %98, %97 : vector<16x16xf32>
    %c1_i32_51 = arith.constant 1 : i32
    %100 = vector.broadcast %c1_i32_51 : i32 to vector<16x16xi32>
    %101 = arith.cmpi sge, %9, %100 : vector<16x16xi32>
    %c1_i32_52 = arith.constant 1 : i32
    %102 = tpu.dynamic_rotate %99 by %c1_i32_52 dim 1 : vector<16x16xf32>, i32 -> vector<16x16xf32>
    %cst_53 = arith.constant 0.000000e+00 : f32
    %103 = vector.broadcast %cst_53 : f32 to vector<16x16xf32>
    %104 = arith.select %101, %102, %103 : vector<16x16xi1>, vector<16x16xf32>
    %c14_i32_54 = arith.constant 14 : i32
    %105 = vector.broadcast %c14_i32_54 : i32 to vector<16x16xi32>
    %106 = arith.cmpi sle, %9, %105 : vector<16x16xi32>
    %c15_i32_55 = arith.constant 15 : i32
    %107 = tpu.dynamic_rotate %99 by %c15_i32_55 dim 1 : vector<16x16xf32>, i32 -> vector<16x16xf32>
    %cst_56 = arith.constant 0.000000e+00 : f32
    %108 = vector.broadcast %cst_56 : f32 to vector<16x16xf32>
    %109 = arith.select %106, %107, %108 : vector<16x16xi1>, vector<16x16xf32>
    %110 = arith.addf %99, %104 : vector<16x16xf32>
    %111 = arith.addf %110, %109 : vector<16x16xf32>
    %112 = arith.mulf %111, %36 : vector<16x16xf32>
    %113 = arith.mulf %61, %86 : vector<16x16xf32>
    %114 = arith.subf %112, %113 : vector<16x16xf32>
    %115 = arith.mulf %1, %1 : vector<16x16xf32>
    %c1_i32_57 = arith.constant 1 : i32
    %116 = vector.broadcast %c1_i32_57 : i32 to vector<16x16xi32>
    %117 = arith.cmpi sge, %8, %116 : vector<16x16xi32>
    %c1_i32_58 = arith.constant 1 : i32
    %118 = tpu.dynamic_rotate %115 by %c1_i32_58 dim 0 : vector<16x16xf32>, i32 -> vector<16x16xf32>
    %cst_59 = arith.constant 0.000000e+00 : f32
    %119 = vector.broadcast %cst_59 : f32 to vector<16x16xf32>
    %120 = arith.select %117, %118, %119 : vector<16x16xi1>, vector<16x16xf32>
    %c14_i32_60 = arith.constant 14 : i32
    %121 = vector.broadcast %c14_i32_60 : i32 to vector<16x16xi32>
    %122 = arith.cmpi sle, %8, %121 : vector<16x16xi32>
    %c15_i32_61 = arith.constant 15 : i32
    %123 = tpu.dynamic_rotate %115 by %c15_i32_61 dim 0 : vector<16x16xf32>, i32 -> vector<16x16xf32>
    %cst_62 = arith.constant 0.000000e+00 : f32
    %124 = vector.broadcast %cst_62 : f32 to vector<16x16xf32>
    %125 = arith.select %122, %123, %124 : vector<16x16xi1>, vector<16x16xf32>
    %126 = arith.addf %115, %120 : vector<16x16xf32>
    %127 = arith.addf %126, %125 : vector<16x16xf32>
    %c1_i32_63 = arith.constant 1 : i32
    %128 = vector.broadcast %c1_i32_63 : i32 to vector<16x16xi32>
    %129 = arith.cmpi sge, %9, %128 : vector<16x16xi32>
    %c1_i32_64 = arith.constant 1 : i32
    %130 = tpu.dynamic_rotate %127 by %c1_i32_64 dim 1 : vector<16x16xf32>, i32 -> vector<16x16xf32>
    %cst_65 = arith.constant 0.000000e+00 : f32
    %131 = vector.broadcast %cst_65 : f32 to vector<16x16xf32>
    %132 = arith.select %129, %130, %131 : vector<16x16xi1>, vector<16x16xf32>
    %c14_i32_66 = arith.constant 14 : i32
    %133 = vector.broadcast %c14_i32_66 : i32 to vector<16x16xi32>
    %134 = arith.cmpi sle, %9, %133 : vector<16x16xi32>
    %c15_i32_67 = arith.constant 15 : i32
    %135 = tpu.dynamic_rotate %127 by %c15_i32_67 dim 1 : vector<16x16xf32>, i32 -> vector<16x16xf32>
    %cst_68 = arith.constant 0.000000e+00 : f32
    %136 = vector.broadcast %cst_68 : f32 to vector<16x16xf32>
    %137 = arith.select %134, %135, %136 : vector<16x16xi1>, vector<16x16xf32>
    %138 = arith.addf %127, %132 : vector<16x16xf32>
    %139 = arith.addf %138, %137 : vector<16x16xf32>
    %140 = arith.mulf %139, %36 : vector<16x16xf32>
    %141 = arith.mulf %61, %61 : vector<16x16xf32>
    %142 = arith.subf %140, %141 : vector<16x16xf32>
    %cst_69 = arith.constant 9.99999993E-9 : f32
    %143 = vector.broadcast %cst_69 : f32 to vector<16x16xf32>
    %144 = arith.addf %142, %143 : vector<16x16xf32>
    %145 = arith.divf %114, %144 : vector<16x16xf32>
    %146 = arith.mulf %145, %61 : vector<16x16xf32>
    %147 = arith.subf %86, %146 : vector<16x16xf32>
    %c1_i32_70 = arith.constant 1 : i32
    %148 = vector.broadcast %c1_i32_70 : i32 to vector<16x16xi32>
    %149 = arith.cmpi sge, %8, %148 : vector<16x16xi32>
    %c1_i32_71 = arith.constant 1 : i32
    %150 = tpu.dynamic_rotate %145 by %c1_i32_71 dim 0 : vector<16x16xf32>, i32 -> vector<16x16xf32>
    %cst_72 = arith.constant 0.000000e+00 : f32
    %151 = vector.broadcast %cst_72 : f32 to vector<16x16xf32>
    %152 = arith.select %149, %150, %151 : vector<16x16xi1>, vector<16x16xf32>
    %c14_i32_73 = arith.constant 14 : i32
    %153 = vector.broadcast %c14_i32_73 : i32 to vector<16x16xi32>
    %154 = arith.cmpi sle, %8, %153 : vector<16x16xi32>
    %c15_i32_74 = arith.constant 15 : i32
    %155 = tpu.dynamic_rotate %145 by %c15_i32_74 dim 0 : vector<16x16xf32>, i32 -> vector<16x16xf32>
    %cst_75 = arith.constant 0.000000e+00 : f32
    %156 = vector.broadcast %cst_75 : f32 to vector<16x16xf32>
    %157 = arith.select %154, %155, %156 : vector<16x16xi1>, vector<16x16xf32>
    %158 = arith.addf %145, %152 : vector<16x16xf32>
    %159 = arith.addf %158, %157 : vector<16x16xf32>
    %c1_i32_76 = arith.constant 1 : i32
    %160 = vector.broadcast %c1_i32_76 : i32 to vector<16x16xi32>
    %161 = arith.cmpi sge, %9, %160 : vector<16x16xi32>
    %c1_i32_77 = arith.constant 1 : i32
    %162 = tpu.dynamic_rotate %159 by %c1_i32_77 dim 1 : vector<16x16xf32>, i32 -> vector<16x16xf32>
    %cst_78 = arith.constant 0.000000e+00 : f32
    %163 = vector.broadcast %cst_78 : f32 to vector<16x16xf32>
    %164 = arith.select %161, %162, %163 : vector<16x16xi1>, vector<16x16xf32>
    %c14_i32_79 = arith.constant 14 : i32
    %165 = vector.broadcast %c14_i32_79 : i32 to vector<16x16xi32>
    %166 = arith.cmpi sle, %9, %165 : vector<16x16xi32>
    %c15_i32_80 = arith.constant 15 : i32
    %167 = tpu.dynamic_rotate %159 by %c15_i32_80 dim 1 : vector<16x16xf32>, i32 -> vector<16x16xf32>
    %cst_81 = arith.constant 0.000000e+00 : f32
    %168 = vector.broadcast %cst_81 : f32 to vector<16x16xf32>
    %169 = arith.select %166, %167, %168 : vector<16x16xi1>, vector<16x16xf32>
    %170 = arith.addf %159, %164 : vector<16x16xf32>
    %171 = arith.addf %170, %169 : vector<16x16xf32>
    %172 = arith.mulf %171, %36 : vector<16x16xf32>
    %c1_i32_82 = arith.constant 1 : i32
    %173 = vector.broadcast %c1_i32_82 : i32 to vector<16x16xi32>
    %174 = arith.cmpi sge, %8, %173 : vector<16x16xi32>
    %c1_i32_83 = arith.constant 1 : i32
    %175 = tpu.dynamic_rotate %147 by %c1_i32_83 dim 0 : vector<16x16xf32>, i32 -> vector<16x16xf32>
    %cst_84 = arith.constant 0.000000e+00 : f32
    %176 = vector.broadcast %cst_84 : f32 to vector<16x16xf32>
    %177 = arith.select %174, %175, %176 : vector<16x16xi1>, vector<16x16xf32>
    %c14_i32_85 = arith.constant 14 : i32
    %178 = vector.broadcast %c14_i32_85 : i32 to vector<16x16xi32>
    %179 = arith.cmpi sle, %8, %178 : vector<16x16xi32>
    %c15_i32_86 = arith.constant 15 : i32
    %180 = tpu.dynamic_rotate %147 by %c15_i32_86 dim 0 : vector<16x16xf32>, i32 -> vector<16x16xf32>
    %cst_87 = arith.constant 0.000000e+00 : f32
    %181 = vector.broadcast %cst_87 : f32 to vector<16x16xf32>
    %182 = arith.select %179, %180, %181 : vector<16x16xi1>, vector<16x16xf32>
    %183 = arith.addf %147, %177 : vector<16x16xf32>
    %184 = arith.addf %183, %182 : vector<16x16xf32>
    %c1_i32_88 = arith.constant 1 : i32
    %185 = vector.broadcast %c1_i32_88 : i32 to vector<16x16xi32>
    %186 = arith.cmpi sge, %9, %185 : vector<16x16xi32>
    %c1_i32_89 = arith.constant 1 : i32
    %187 = tpu.dynamic_rotate %184 by %c1_i32_89 dim 1 : vector<16x16xf32>, i32 -> vector<16x16xf32>
    %cst_90 = arith.constant 0.000000e+00 : f32
    %188 = vector.broadcast %cst_90 : f32 to vector<16x16xf32>
    %189 = arith.select %186, %187, %188 : vector<16x16xi1>, vector<16x16xf32>
    %c14_i32_91 = arith.constant 14 : i32
    %190 = vector.broadcast %c14_i32_91 : i32 to vector<16x16xi32>
    %191 = arith.cmpi sle, %9, %190 : vector<16x16xi32>
    %c15_i32_92 = arith.constant 15 : i32
    %192 = tpu.dynamic_rotate %184 by %c15_i32_92 dim 1 : vector<16x16xf32>, i32 -> vector<16x16xf32>
    %cst_93 = arith.constant 0.000000e+00 : f32
    %193 = vector.broadcast %cst_93 : f32 to vector<16x16xf32>
    %194 = arith.select %191, %192, %193 : vector<16x16xi1>, vector<16x16xf32>
    %195 = arith.addf %184, %189 : vector<16x16xf32>
    %196 = arith.addf %195, %194 : vector<16x16xf32>
    %197 = arith.mulf %196, %36 : vector<16x16xf32>
    %198 = arith.mulf %172, %1 : vector<16x16xf32>
    %199 = arith.addf %198, %197 : vector<16x16xf32>
    %c0_94 = arith.constant 0 : index
    %c0_95 = arith.constant 0 : index
    %c0_96 = arith.constant 0 : index
    %200 = vector.load %arg5[%c0_94, %c0_95, %c0_96] : memref<1x16x16xf32, #tpu.memory_space<vmem>>, vector<1x16x16xf32>
    %201 = vector.shape_cast %200 : vector<1x16x16xf32> to vector<16x16xf32>
    %202 = vector.shape_cast %199 : vector<16x16xf32> to vector<1x16x16xf32>
    tpu.vector_store %arg5[%c0_94, %c0_95, %c0_96], %202 {strides = array<i32>} : memref<1x16x16xf32, #tpu.memory_space<vmem>>, vector<1x16x16xf32>,
    return
  }
  func.func @transform_0(%arg0: i32) -> (i32, i32, i32) {
    %c0_i32 = arith.constant 0 : i32
    %c0_i32_0 = arith.constant 0 : i32
    %c0_i32_1 = arith.constant 0 : i32
    return %arg0, %c0_i32, %c0_i32_0 : i32, i32, i32
  }
  func.func @transform_1(%arg0: i32) -> (i32, i32, i32) {
    %c0_i32 = arith.constant 0 : i32
    %c0_i32_0 = arith.constant 0 : i32
    %c0_i32_1 = arith.constant 0 : i32
    return %arg0, %c0_i32, %c0_i32_0 : i32, i32, i32
  }
  func.func @transform_2(%arg0: i32) -> (i32, i32) {
    %c0_i32 = arith.constant 0 : i32
    %c0_i32_0 = arith.constant 0 : i32
    %c0_i32_1 = arith.constant 0 : i32
    return %c0_i32, %c0_i32_0 : i32, i32
  }
  func.func @transform_3(%arg0: i32) -> (i32, i32) {
    %c0_i32 = arith.constant 0 : i32
    %c0_i32_0 = arith.constant 0 : i32
    %c0_i32_1 = arith.constant 0 : i32
    return %c0_i32, %c0_i32_0 : i32, i32
  }
  func.func @transform_4(%arg0: i32) -> (i32, i32, i32) {
    %c0_i32 = arith.constant 0 : i32
    %c0_i32_0 = arith.constant 0 : i32
    %c0_i32_1 = arith.constant 0 : i32
    return %arg0, %c0_i32, %c0_i32_0 : i32, i32, i32
  }
}

</mosaic_0001>

<llo_original>
// kernel: refine_dgf_forward.2
$region0: #{refine_dgf_forward.2}
  #allocation0 [shape = 'u32[]', space=smem, size = 0x4, offset = 0x4, fixed_abs, tag = 'smem constant byte address 0x4 - core index']
  #allocation1 [shape = 'u32[144,128]{1,0:T(1,128)}', space=vmem, size = 0x12000, scoped, tag = 'internal scratch']
  #allocation2 [shape = 'f32[1,1]{1,0:T(1,128)S(1)}', space=vmem, size = 0x200, scoped, tag = 'scoped memory for refine_dgf_forward.2']
  %s0 = inlined_call_operand.vmem [shape: f32[8,512], index: 0, kind: input, shape index: {}]
  %s1 = inlined_call_operand.vmem [shape: f32[64,8], index: 1, kind: input, shape index: {}]
  %s2 = inlined_call_operand.vmem [shape: f32[64,1], index: 2, kind: input, shape index: {}]
  %s3 = inlined_call_operand.vmem [shape: f32[1,64], index: 3, kind: input, shape index: {}]
  %s4 = inlined_call_operand.<no memory space> [shape: f32[1,1], index: 4, kind: input, shape index: {}]
  %s5 = inlined_call_operand.vmem [shape: f32[1,512], index: 5, kind: output, shape index: {}]
  %s6 = sld [smem:[#allocation0]]
  $region30: #{refine_dgf_forward.2} parent=0
    _
  %s8 = ssub.s32 1, %s6
  %s9 = scalar_select 0, %s8, %s6
  %v10 = vstv %s4
  %11 = vst [vmem:[#allocation2] sm:$0x1] %v10
  // Predicated region
  $region2: #{refine_dgf_forward.2} parent=0 // pred_check
    _
  $region3: #{refine_dgf_forward.2} parent=0 // pred_check_branch
    %13 = sbr.rel (0) target = $region5
  $region4: #{refine_dgf_forward.2} parent=0 // pred_region
    _
  $region5: #{refine_dgf_forward.2} parent=0 // pred_fallthru
    _
  // Predicated region
  $region6: #{refine_dgf_forward.2} parent=0 // pred_check
    _
  $region7: #{refine_dgf_forward.2} parent=0 // pred_check_branch
    %15 = sbr.rel (0) target = $region9
  $region8: #{refine_dgf_forward.2} parent=0 // pred_region
    _
  $region9: #{refine_dgf_forward.2} parent=0 // pred_fallthru
    _
  // Predicated region
  $region10: #{refine_dgf_forward.2} parent=0 // pred_check
    _
  $region11: #{refine_dgf_forward.2} parent=0 // pred_check_branch
    %17 = sbr.rel (0) target = $region13
  $region12: #{refine_dgf_forward.2} parent=0 // pred_region
    _
  $region13: #{refine_dgf_forward.2} parent=0 // pred_fallthru
    _
  // Predicated region
  $region14: #{refine_dgf_forward.2} parent=0 // pred_check
    _
  $region15: #{refine_dgf_forward.2} parent=0 // pred_check_branch
    %19 = sbr.rel (0) target = $region17
  $region16: #{refine_dgf_forward.2} parent=0 // pred_region
    _
  $region17: #{refine_dgf_forward.2} parent=0 // pred_fallthru
    _
  // Predicated region
  $region18: #{refine_dgf_forward.2} parent=0 // pred_check
    _
  $region19: #{refine_dgf_forward.2} parent=0 // pred_check_branch
    %21 = sbr.rel (0) target = $region21
  $region20: #{refine_dgf_forward.2} parent=0 // pred_region
    _
  $region21: #{refine_dgf_forward.2} parent=0 // pred_fallthru
    _
  %v22 = vld [vmem:[%s1] sm:$0xff]
  %v23 = vld [vmem:[%s1 + $0x8] sm:$0xff]
  %v24 = vld [vmem:[%s1 + $0x10] sm:$0xff]
  %v25 = vld [vmem:[%s1 + $0x18] sm:$0xff]
  %v26 = vld [vmem:[%s1 + $0x20] sm:$0xff]
  %v27 = vld [vmem:[%s1 + $0x28] sm:$0xff]
  %v28 = vld [vmem:[%s1 + $0x30] sm:$0xff]
  %v29 = vld [vmem:[%s1 + $0x38] sm:$0xff]
  %v30 = vld [vmem:[%s0] sm:$0xff]
  %v31 = vld [vmem:[%s0 + $0x8] sm:$0xff]
  %v32 = vld [vmem:[%s0 + $0x10] sm:$0xff]
  %v33 = vld [vmem:[%s0 + $0x18] sm:$0xff]
  %v34 = vld [vmem:[%s2] sm:$0xff]
  %v35 = vld [vmem:[%s2 + $0x8] sm:$0xff]
  %v36 = vld [vmem:[%s2 + $0x10] sm:$0xff]
  %v37 = vld [vmem:[%s2 + $0x18] sm:$0xff]
  %v38 = vld [vmem:[%s2 + $0x20] sm:$0xff]
  %v39 = vld [vmem:[%s2 + $0x28] sm:$0xff]
  %v40 = vld [vmem:[%s2 + $0x30] sm:$0xff]
  %v41 = vld [vmem:[%s2 + $0x38] sm:$0xff]
  %43 = vset.pattern.permute.xlu0 0
  %44 = vperm.xlu0 %43, %v34
  %v45 = vpop.permute.xlu0 %44
  %48 = vset.pattern.permute.xlu0 0
  %49 = vperm.xlu0 %48, %v35
  %v50 = vpop.permute.xlu0 %49
  %53 = vset.pattern.permute.xlu0 0
  %54 = vperm.xlu0 %53, %v36
  %v55 = vpop.permute.xlu0 %54
  %58 = vset.pattern.permute.xlu0 0
  %59 = vperm.xlu0 %58, %v37
  %v60 = vpop.permute.xlu0 %59
  %63 = vset.pattern.permute.xlu0 0
  %64 = vperm.xlu0 %63, %v38
  %v65 = vpop.permute.xlu0 %64
  %68 = vset.pattern.permute.xlu0 0
  %69 = vperm.xlu0 %68, %v39
  %v70 = vpop.permute.xlu0 %69
  %73 = vset.pattern.permute.xlu0 0
  %74 = vperm.xlu0 %73, %v40
  %v75 = vpop.permute.xlu0 %74
  %78 = vset.pattern.permute.xlu0 0
  %79 = vperm.xlu0 %78, %v41
  %v80 = vpop.permute.xlu0 %79
  %vm82 = vcmask 64512
  %v84 = vsel %vm82, %v22, 0
  %v87 = vsel %vm82, %v23, 0
  %v90 = vsel %vm82, %v24, 0
  %v93 = vsel %vm82, %v25, 0
  %v96 = vsel %vm82, %v26, 0
  %v99 = vsel %vm82, %v27, 0
  %v102 = vsel %vm82, %v28, 0
  %v105 = vsel %vm82, %v29, 0
  %107 = vmatprep.subr.mxu0 %v31
  %108 = vmatpush1.msra.mxu0 %v30
  %109 = vmatprep.subr.mxu0 0.0
  %110 = vmatpush1.msra.mxu0 0.0
  %111 = vmatprep.subr.mxu0 0.0
  %112 = vmatpush1.msra.mxu0 0.0
  %113 = vmatprep.subr.mxu0 0.0
  %114 = vmatpush1.msra.mxu0 0.0
  %115 = vmatprep.subr.mxu0 0.0
  %116 = vmatpush1.msra.mxu0 0.0
  %117 = vmatprep.subr.mxu0 0.0
  %118 = vmatpush1.msra.mxu0 0.0
  %119 = vmatprep.subr.mxu0 0.0
  %120 = vmatpush1.msra.mxu0 0.0
  %121 = vmatprep.subr.mxu0 0.0
  %122 = vmatpush1.msra.mxu0 0.0
  %123 = vmatprep.subr.mxu0 0.0
  %124 = vmatpush1.msra.mxu0 0.0
  %125 = vmatprep.subr.mxu0 0.0
  %126 = vmatpush1.msra.mxu0 0.0
  %127 = vmatprep.subr.mxu0 0.0
  %128 = vmatpush1.msra.mxu0 0.0
  %129 = vmatprep.subr.mxu0 0.0
  %130 = vmatpush1.msra.mxu0 0.0
  %131 = vmatprep.subr.mxu0 0.0
  %132 = vmatpush1.msra.mxu0 0.0
  %133 = vmatprep.subr.mxu0 0.0
  %134 = vmatpush1.msra.mxu0 0.0
  %135 = vmatprep.subr.mxu0 0.0
  %136 = vmatpush1.msra.mxu0 0.0
  %137 = vmatprep.subr.mxu0 0.0
  %138 = vmatpush1.msra.mxu0 0.0
  %139 = vmatprep.subr.mxu0 0.0
  %140 = vmatpush1.msra.mxu0 0.0
  %141 = vmatprep.subr.mxu0 0.0
  %142 = vmatpush1.msra.mxu0 0.0
  %143 = vmatprep.subr.mxu0 0.0
  %144 = vmatpush1.msra.mxu0 0.0
  %145 = vmatprep.subr.mxu0 0.0
  %146 = vmatpush1.msra.mxu0 0.0
  %147 = vmatprep.subr.mxu0 0.0
  %148 = vmatpush1.msra.mxu0 0.0
  %149 = vmatprep.subr.mxu0 0.0
  %150 = vmatpush1.msra.mxu0 0.0
  %151 = vmatprep.subr.mxu0 0.0
  %152 = vmatpush1.msra.mxu0 0.0
  %153 = vmatprep.subr.mxu0 0.0
  %154 = vmatpush1.msra.mxu0 0.0
  %155 = vmatprep.subr.mxu0 0.0
  %156 = vmatpush1.msra.mxu0 0.0
  %157 = vmatprep.subr.mxu0 0.0
  %158 = vmatpush1.msra.mxu0 0.0
  %159 = vmatprep.subr.mxu0 0.0
  %160 = vmatpush1.msra.mxu0 0.0
  %161 = vmatprep.subr.mxu0 0.0
  %162 = vmatpush1.msra.mxu0 0.0
  %163 = vmatprep.subr.mxu0 0.0
  %164 = vmatpush1.msra.mxu0 0.0
  %165 = vmatprep.subr.mxu0 0.0
  %166 = vmatpush1.msra.mxu0 0.0
  %167 = vmatprep.subr.mxu0 0.0
  %168 = vmatpush1.msra.mxu0 0.0
  %169 = vmatprep.subr.mxu0 0.0
  %170 = vmatpush1.msra.mxu0 0.0
  %171 = vmatprep.mubr.f32.mxu0 0.0
  %172 = vmatmul.mubr.f32.gmra.mrb[0].mxu0 %v84
  %v173 = vpop.f32.mrb[0].mxu0
  %v174 = vadd.f32 %v45, %v173
  %v175 = vpop.f32.mrb[0].mxu0
  %v176 = vadd.f32 %v45, %v175
  %177 = vmatprep.mubr.f32.mxu0 0.0
  %178 = vmatmul.mubr.f32.gmra.mrb[0].mxu0 %v87
  %v179 = vpop.f32.mrb[0].mxu0
  %v180 = vadd.f32 %v50, %v179
  %v181 = vpop.f32.mrb[0].mxu0
  %v182 = vadd.f32 %v50, %v181
  %183 = vmatprep.mubr.f32.mxu0 0.0
  %184 = vmatmul.mubr.f32.gmra.mrb[0].mxu0 %v90
  %v185 = vpop.f32.mrb[0].mxu0
  %v186 = vadd.f32 %v55, %v185
  %v187 = vpop.f32.mrb[0].mxu0
  %v188 = vadd.f32 %v55, %v187
  %189 = vmatprep.mubr.f32.mxu0 0.0
  %190 = vmatmul.mubr.f32.gmra.mrb[0].mxu0 %v93
  %v191 = vpop.f32.mrb[0].mxu0
  %v192 = vadd.f32 %v60, %v191
  %v193 = vpop.f32.mrb[0].mxu0
  %v194 = vadd.f32 %v60, %v193
  %195 = vmatprep.mubr.f32.mxu0 0.0
  %196 = vmatmul.mubr.f32.gmra.mrb[0].mxu0 %v96
  %v197 = vpop.f32.mrb[0].mxu0
  %v198 = vadd.f32 %v65, %v197
  %v199 = vpop.f32.mrb[0].mxu0
  %v200 = vadd.f32 %v65, %v199
  %201 = vmatprep.mubr.f32.mxu0 0.0
  %202 = vmatmul.mubr.f32.gmra.mrb[0].mxu0 %v99
  %v203 = vpop.f32.mrb[0].mxu0
  %v204 = vadd.f32 %v70, %v203
  %v205 = vpop.f32.mrb[0].mxu0
  %v206 = vadd.f32 %v70, %v205
  %207 = vmatprep.mubr.f32.mxu0 0.0
  %208 = vmatmul.mubr.f32.gmra.mrb[0].mxu0 %v102
  %v209 = vpop.f32.mrb[0].mxu0
  %v210 = vadd.f32 %v75, %v209
  %v211 = vpop.f32.mrb[0].mxu0
  %v212 = vadd.f32 %v75, %v211
  %213 = vmatprep.mubr.f32.mxu0 0.0
  %214 = vmatmul.mubr.f32.gmra.mrb[0].mxu0 %v105
  %v215 = vpop.f32.mrb[0].mxu0
  %v216 = vadd.f32 %v80, %v215
  %v217 = vpop.f32.mrb[0].mxu0
  %v218 = vadd.f32 %v80, %v217
  %219 = vdwg.mxu0
  %220 = vmatprep.subr.mxu0 %v33
  %221 = vmatpush1.msra.mxu0 %v32
  %222 = vmatprep.subr.mxu0 0.0
  %223 = vmatpush1.msra.mxu0 0.0
  %224 = vmatprep.subr.mxu0 0.0
  %225 = vmatpush1.msra.mxu0 0.0
  %226 = vmatprep.subr.mxu0 0.0
  %227 = vmatpush1.msra.mxu0 0.0
  %228 = vmatprep.subr.mxu0 0.0
  %229 = vmatpush1.msra.mxu0 0.0
  %230 = vmatprep.subr.mxu0 0.0
  %231 = vmatpush1.msra.mxu0 0.0
  %232 = vmatprep.subr.mxu0 0.0
  %233 = vmatpush1.msra.mxu0 0.0
  %234 = vmatprep.subr.mxu0 0.0
  %235 = vmatpush1.msra.mxu0 0.0
  %236 = vmatprep.subr.mxu0 0.0
  %237 = vmatpush1.msra.mxu0 0.0
  %238 = vmatprep.subr.mxu0 0.0
  %239 = vmatpush1.msra.mxu0 0.0
  %240 = vmatprep.subr.mxu0 0.0
  %241 = vmatpush1.msra.mxu0 0.0
  %242 = vmatprep.subr.mxu0 0.0
  %243 = vmatpush1.msra.mxu0 0.0
  %244 = vmatprep.subr.mxu0 0.0
  %245 = vmatpush1.msra.mxu0 0.0
  %246 = vmatprep.subr.mxu0 0.0
  %247 = vmatpush1.msra.mxu0 0.0
  %248 = vmatprep.subr.mxu0 0.0
  %249 = vmatpush1.msra.mxu0 0.0
  %250 = vmatprep.subr.mxu0 0.0
  %251 = vmatpush1.msra.mxu0 0.0
  %252 = vmatprep.subr.mxu0 0.0
  %253 = vmatpush1.msra.mxu0 0.0
  %254 = vmatprep.subr.mxu0 0.0
  %255 = vmatpush1.msra.mxu0 0.0
  %256 = vmatprep.subr.mxu0 0.0
  %257 = vmatpush1.msra.mxu0 0.0
  %258 = vmatprep.subr.mxu0 0.0
  %259 = vmatpush1.msra.mxu0 0.0
  %260 = vmatprep.subr.mxu0 0.0
  %261 = vmatpush1.msra.mxu0 0.0
  %262 = vmatprep.subr.mxu0 0.0
  %263 = vmatpush1.msra.mxu0 0.0
  %264 = vmatprep.subr.mxu0 0.0
  %265 = vmatpush1.msra.mxu0 0.0
  %266 = vmatprep.subr.mxu0 0.0
  %267 = vmatpush1.msra.mxu0 0.0
  %268 = vmatprep.subr.mxu0 0.0
  %269 = vmatpush1.msra.mxu0 0.0
  %270 = vmatprep.subr.mxu0 0.0
  %271 = vmatpush1.msra.mxu0 0.0
  %272 = vmatprep.subr.mxu0 0.0
  %273 = vmatpush1.msra.mxu0 0.0
  %274 = vmatprep.subr.mxu0 0.0
  %275 = vmatpush1.msra.mxu0 0.0
  %276 = vmatprep.subr.mxu0 0.0
  %277 = vmatpush1.msra.mxu0 0.0
  %278 = vmatprep.subr.mxu0 0.0
  %279 = vmatpush1.msra.mxu0 0.0
  %280 = vmatprep.subr.mxu0 0.0
  %281 = vmatpush1.msra.mxu0 0.0
  %282 = vmatprep.subr.mxu0 0.0
  %283 = vmatpush1.msra.mxu0 0.0
  %284 = vmatprep.mubr.f32.mxu0 0.0
  %285 = vmatmul.mubr.f32.gmra.mrb[0].mxu0 %v84
  %v286 = vpop.f32.mrb[0].mxu0
  %v287 = vadd.f32 %v45, %v286
  %v288 = vpop.f32.mrb[0].mxu0
  %v289 = vadd.f32 %v45, %v288
  %290 = vmatprep.mubr.f32.mxu0 0.0
  %291 = vmatmul.mubr.f32.gmra.mrb[0].mxu0 %v87
  %v292 = vpop.f32.mrb[0].mxu0
  %v293 = vadd.f32 %v50, %v292
  %v294 = vpop.f32.mrb[0].mxu0
  %v295 = vadd.f32 %v50, %v294
  %296 = vmatprep.mubr.f32.mxu0 0.0
  %297 = vmatmul.mubr.f32.gmra.mrb[0].mxu0 %v90
  %v298 = vpop.f32.mrb[0].mxu0
  %v299 = vadd.f32 %v55, %v298
  %v300 = vpop.f32.mrb[0].mxu0
  %v301 = vadd.f32 %v55, %v300
  %302 = vmatprep.mubr.f32.mxu0 0.0
  %303 = vmatmul.mubr.f32.gmra.mrb[0].mxu0 %v93
  %v304 = vpop.f32.mrb[0].mxu0
  %v305 = vadd.f32 %v60, %v304
  %v306 = vpop.f32.mrb[0].mxu0
  %v307 = vadd.f32 %v60, %v306
  %308 = vmatprep.mubr.f32.mxu0 0.0
  %309 = vmatmul.mubr.f32.gmra.mrb[0].mxu0 %v96
  %v310 = vpop.f32.mrb[0].mxu0
  %v311 = vadd.f32 %v65, %v310
  %v312 = vpop.f32.mrb[0].mxu0
  %v313 = vadd.f32 %v65, %v312
  %314 = vmatprep.mubr.f32.mxu0 0.0
  %315 = vmatmul.mubr.f32.gmra.mrb[0].mxu0 %v99
  %v316 = vpop.f32.mrb[0].mxu0
  %v317 = vadd.f32 %v70, %v316
  %v318 = vpop.f32.mrb[0].mxu0
  %v319 = vadd.f32 %v70, %v318
  %320 = vmatprep.mubr.f32.mxu0 0.0
  %321 = vmatmul.mubr.f32.gmra.mrb[0].mxu0 %v102
  %v322 = vpop.f32.mrb[0].mxu0
  %v323 = vadd.f32 %v75, %v322
  %v324 = vpop.f32.mrb[0].mxu0
  %v325 = vadd.f32 %v75, %v324
  %326 = vmatprep.mubr.f32.mxu0 0.0
  %327 = vmatmul.mubr.f32.gmra.mrb[0].mxu0 %v105
  %v328 = vpop.f32.mrb[0].mxu0
  %v329 = vadd.f32 %v80, %v328
  %v330 = vpop.f32.mrb[0].mxu0
  %v331 = vadd.f32 %v80, %v330
  %332 = vdwg.mxu0
  %v333 = vmax.f32 %v174, 0.0
  %v334 = vmax.f32 %v176, 0.0
  %v335 = vmax.f32 %v287, 0.0
  %v336 = vmax.f32 %v289, 0.0
  %v337 = vmax.f32 %v180, 0.0
  %v338 = vmax.f32 %v182, 0.0
  %v339 = vmax.f32 %v293, 0.0
  %v340 = vmax.f32 %v295, 0.0
  %v341 = vmax.f32 %v186, 0.0
  %v342 = vmax.f32 %v188, 0.0
  %v343 = vmax.f32 %v299, 0.0
  %v344 = vmax.f32 %v301, 0.0
  %v345 = vmax.f32 %v192, 0.0
  %v346 = vmax.f32 %v194, 0.0
  %v347 = vmax.f32 %v305, 0.0
  %v348 = vmax.f32 %v307, 0.0
  %v349 = vmax.f32 %v198, 0.0
  %v350 = vmax.f32 %v200, 0.0
  %v351 = vmax.f32 %v311, 0.0
  %v352 = vmax.f32 %v313, 0.0
  %v353 = vmax.f32 %v204, 0.0
  %v354 = vmax.f32 %v206, 0.0
  %v355 = vmax.f32 %v317, 0.0
  %v356 = vmax.f32 %v319, 0.0
  %v357 = vmax.f32 %v210, 0.0
  %v358 = vmax.f32 %v212, 0.0
  %v359 = vmax.f32 %v323, 0.0
  %v360 = vmax.f32 %v325, 0.0
  %v361 = vmax.f32 %v216, 0.0
  %v362 = vmax.f32 %v218, 0.0
  %v363 = vmax.f32 %v329, 0.0
  %v364 = vmax.f32 %v331, 0.0
  %v365 = vld [vmem:[%s3] sm:$0x1]
  %v366 = vld [vmem:[#allocation2] sm:$0x1]
  %368 = vset.pattern.permute.xlu0 0
  %369 = vperm.xlu0 %368, %v366
  %v370 = vpop.permute.xlu0 %369
  %v372 = vlaneseq
  %v373 = vshrl.u32 %v372, 7
  %v374 = vsub.s32 0, %v373
  %v375 = vrot.slane %v370, %v374
  %vm376 = vcmask 523264
  %v378 = vsel %vm376, %v365, 0
  %380 = vmatprep.subr.mxu0 %v334
  %381 = vmatpush1.msra.mxu0 %v333
  %382 = vmatprep.subr.mxu0 %v338
  %383 = vmatpush1.msra.mxu0 %v337
  %384 = vmatprep.subr.mxu0 %v342
  %385 = vmatpush1.msra.mxu0 %v341
  %386 = vmatprep.subr.mxu0 %v346
  %387 = vmatpush1.msra.mxu0 %v345
  %388 = vmatprep.subr.mxu0 %v350
  %389 = vmatpush1.msra.mxu0 %v349
  %390 = vmatprep.subr.mxu0 %v354
  %391 = vmatpush1.msra.mxu0 %v353
  %392 = vmatprep.subr.mxu0 %v358
  %393 = vmatpush1.msra.mxu0 %v357
  %394 = vmatprep.subr.mxu0 %v362
  %395 = vmatpush1.msra.mxu0 %v361
  %396 = vmatprep.subr.mxu0 0.0
  %397 = vmatpush1.msra.mxu0 0.0
  %398 = vmatprep.subr.mxu0 0.0
  %399 = vmatpush1.msra.mxu0 0.0
  %400 = vmatprep.subr.mxu0 0.0
  %401 = vmatpush1.msra.mxu0 0.0
  %402 = vmatprep.subr.mxu0 0.0
  %403 = vmatpush1.msra.mxu0 0.0
  %404 = vmatprep.subr.mxu0 0.0
  %405 = vmatpush1.msra.mxu0 0.0
  %406 = vmatprep.subr.mxu0 0.0
  %407 = vmatpush1.msra.mxu0 0.0
  %408 = vmatprep.subr.mxu0 0.0
  %409 = vmatpush1.msra.mxu0 0.0
  %410 = vmatprep.subr.mxu0 0.0
  %411 = vmatpush1.msra.mxu0 0.0
  %412 = vmatprep.subr.mxu0 0.0
  %413 = vmatpush1.msra.mxu0 0.0
  %414 = vmatprep.subr.mxu0 0.0
  %415 = vmatpush1.msra.mxu0 0.0
  %416 = vmatprep.subr.mxu0 0.0
  %417 = vmatpush1.msra.mxu0 0.0
  %418 = vmatprep.subr.mxu0 0.0
  %419 = vmatpush1.msra.mxu0 0.0
  %420 = vmatprep.subr.mxu0 0.0
  %421 = vmatpush1.msra.mxu0 0.0
  %422 = vmatprep.subr.mxu0 0.0
  %423 = vmatpush1.msra.mxu0 0.0
  %424 = vmatprep.subr.mxu0 0.0
  %425 = vmatpush1.msra.mxu0 0.0
  %426 = vmatprep.subr.mxu0 0.0
  %427 = vmatpush1.msra.mxu0 0.0
  %428 = vmatprep.subr.mxu0 0.0
  %429 = vmatpush1.msra.mxu0 0.0
  %430 = vmatprep.subr.mxu0 0.0
  %431 = vmatpush1.msra.mxu0 0.0
  %432 = vmatprep.subr.mxu0 0.0
  %433 = vmatpush1.msra.mxu0 0.0
  %434 = vmatprep.subr.mxu0 0.0
  %435 = vmatpush1.msra.mxu0 0.0
  %436 = vmatprep.subr.mxu0 0.0
  %437 = vmatpush1.msra.mxu0 0.0
  %438 = vmatprep.subr.mxu0 0.0
  %439 = vmatpush1.msra.mxu0 0.0
  %440 = vmatprep.subr.mxu0 0.0
  %441 = vmatpush1.msra.mxu0 0.0
  %442 = vmatprep.subr.mxu0 0.0
  %443 = vmatpush1.msra.mxu0 0.0
  %444 = vmatprep.mubr.f32.mxu0 0.0
  %445 = vmatmul.mubr.f32.gmra.mrb[0].mxu0 %v378
  %v446 = vpop.f32.mrb[0].mxu0
  %v447 = vadd.f32 %v375, %v446
  %v448 = vpop.f32.mrb[0].mxu0
  %v449 = vadd.f32 %v375, %v448
  %450 = vdwg.mxu0
  %451 = vmatprep.subr.mxu0 %v336
  %452 = vmatpush1.msra.mxu0 %v335
  %453 = vmatprep.subr.mxu0 %v340
  %454 = vmatpush1.msra.mxu0 %v339
  %455 = vmatprep.subr.mxu0 %v344
  %456 = vmatpush1.msra.mxu0 %v343
  %457 = vmatprep.subr.mxu0 %v348
  %458 = vmatpush1.msra.mxu0 %v347
  %459 = vmatprep.subr.mxu0 %v352
  %460 = vmatpush1.msra.mxu0 %v351
  %461 = vmatprep.subr.mxu0 %v356
  %462 = vmatpush1.msra.mxu0 %v355
  %463 = vmatprep.subr.mxu0 %v360
  %464 = vmatpush1.msra.mxu0 %v359
  %465 = vmatprep.subr.mxu0 %v364
  %466 = vmatpush1.msra.mxu0 %v363
  %467 = vmatprep.subr.mxu0 0.0
  %468 = vmatpush1.msra.mxu0 0.0
  %469 = vmatprep.subr.mxu0 0.0
  %470 = vmatpush1.msra.mxu0 0.0
  %471 = vmatprep.subr.mxu0 0.0
  %472 = vmatpush1.msra.mxu0 0.0
  %473 = vmatprep.subr.mxu0 0.0
  %474 = vmatpush1.msra.mxu0 0.0
  %475 = vmatprep.subr.mxu0 0.0
  %476 = vmatpush1.msra.mxu0 0.0
  %477 = vmatprep.subr.mxu0 0.0
  %478 = vmatpush1.msra.mxu0 0.0
  %479 = vmatprep.subr.mxu0 0.0
  %480 = vmatpush1.msra.mxu0 0.0
  %481 = vmatprep.subr.mxu0 0.0
  %482 = vmatpush1.msra.mxu0 0.0
  %483 = vmatprep.subr.mxu0 0.0
  %484 = vmatpush1.msra.mxu0 0.0
  %485 = vmatprep.subr.mxu0 0.0
  %486 = vmatpush1.msra.mxu0 0.0
  %487 = vmatprep.subr.mxu0 0.0
  %488 = vmatpush1.msra.mxu0 0.0
  %489 = vmatprep.subr.mxu0 0.0
  %490 = vmatpush1.msra.mxu0 0.0
  %491 = vmatprep.subr.mxu0 0.0
  %492 = vmatpush1.msra.mxu0 0.0
  %493 = vmatprep.subr.mxu0 0.0
  %494 = vmatpush1.msra.mxu0 0.0
  %495 = vmatprep.subr.mxu0 0.0
  %496 = vmatpush1.msra.mxu0 0.0
  %497 = vmatprep.subr.mxu0 0.0
  %498 = vmatpush1.msra.mxu0 0.0
  %499 = vmatprep.subr.mxu0 0.0
  %500 = vmatpush1.msra.mxu0 0.0
  %501 = vmatprep.subr.mxu0 0.0
  %502 = vmatpush1.msra.mxu0 0.0
  %503 = vmatprep.subr.mxu0 0.0
  %504 = vmatpush1.msra.mxu0 0.0
  %505 = vmatprep.subr.mxu0 0.0
  %506 = vmatpush1.msra.mxu0 0.0
  %507 = vmatprep.subr.mxu0 0.0
  %508 = vmatpush1.msra.mxu0 0.0
  %509 = vmatprep.subr.mxu0 0.0
  %510 = vmatpush1.msra.mxu0 0.0
  %511 = vmatprep.subr.mxu0 0.0
  %512 = vmatpush1.msra.mxu0 0.0
  %513 = vmatprep.subr.mxu0 0.0
  %514 = vmatpush1.msra.mxu0 0.0
  %515 = vmatprep.mubr.f32.mxu0 0.0
  %516 = vmatmul.mubr.f32.gmra.mrb[0].mxu0 %v378
  %v517 = vpop.f32.mrb[0].mxu0
  %v518 = vadd.f32 %v375, %v517
  %v519 = vpop.f32.mrb[0].mxu0
  %v520 = vadd.f32 %v375, %v519
  %521 = vdwg.mxu0
  %v526 = vcombine.low %v447, %v449
  %v527 = vcombine.low %v518, %v520
  %v529 = vunpack.c.l.s4 1966171168
  %v530 = vunpack.c.0.s8 %v529
  %v531 = vlaneseq
  %v532 = vshrl.u32 %v531, 7
  %v533 = vsub.s32 %v530, %v532
  %v534 = vrot.slane %v526, %v533
  %v536 = vunpack.c.l.s4 1966171168
  %v537 = vunpack.c.0.s8 %v536
  %v538 = vlaneseq
  %v539 = vshrl.u32 %v538, 7
  %v540 = vsub.s32 %v537, %v539
  %v541 = vrot.slane %v527, %v540
  %v542 = vcombine.low %v534, %v541
  %v544 = vunpack.c.l.s4 1966171168
  %v545 = vunpack.c.0.s8 %v544
  %v546 = vlaneseq
  %v547 = vshrl.u32 %v546, 7
  %v548 = vsub.s32 %v545, %v547
  %v549 = vrot.slane %v542, %v548
  %v551 = vlaneseq
  %vm552 = vcmp.ge.s32.totalorder %v551, 0
  %vm553 = vcmp.lt.s32.totalorder %v551, 512
  %vm554 = vmand %vm552, %vm553
  %555 = vst.msk [vmem:[%s5] sm:$0xf] %vm554, %v549
  // Predicated region
  $region22: #{refine_dgf_forward.2} parent=0 // pred_check
    _
  $region23: #{refine_dgf_forward.2} parent=0 // pred_check_branch
    %557 = sbr.rel (0) target = $region25
  $region24: #{refine_dgf_forward.2} parent=0 // pred_region
    _
  $region25: #{refine_dgf_forward.2} parent=0 // pred_fallthru
    _
  // Predicated region
  $region26: #{refine_dgf_forward.2} parent=0 // pred_check
    _
  $region27: #{refine_dgf_forward.2} parent=0 // pred_check_branch
    %559 = sbr.rel (0) target = $region29
  $region28: #{refine_dgf_forward.2} parent=0 // pred_region
    _
  $region29: #{refine_dgf_forward.2} parent=0 // pred_fallthru
    _

// kernel: refine_dgf_forward.3
$region0: #{refine_dgf_forward.3}
  #allocation0 [shape = 'u32[]', space=smem, size = 0x4, offset = 0x4, fixed_abs, tag = 'smem constant byte address 0x4 - core index']
  #allocation1 [shape = 'u32[144,128]{1,0:T(1,128)}', space=vmem, size = 0x12000, scoped, tag = 'internal scratch']
  %s0 = inlined_call_operand.vmem [shape: f32[2,16,16], index: 0, kind: input, shape index: {}]
  %s1 = inlined_call_operand.vmem [shape: f32[2,8,8], index: 1, kind: input, shape index: {}]
  %s2 = inlined_call_operand.vmem [shape: f32[16,8], index: 2, kind: input, shape index: {}]
  %s3 = inlined_call_operand.vmem [shape: f32[8,16], index: 3, kind: input, shape index: {}]
  %s4 = inlined_call_operand.hbm [shape: f32[2,16,16], index: 4, kind: output, shape index: {}]
  %s5 = sld [smem:[#allocation0]]
  $region49: #{refine_dgf_forward.3} parent=0
    _
  %s7 = ssub.s32 1, %s5
  %s8 = scalar_select 0, %s7, %s5
  $region1: #{refine_dgf_forward.3} parent=0
    #allocation2 [shape = 'u8[16384]{0}', space=vmem, size = 0x4000, scoped, tag = 'output window, operand 0']
    #allocation3 [shape = 's32[2]{0}', space=sflag, size = 0x8, scoped, tag = 'scoped memory for refine_dgf_forward.3']
    %9 = vsyncpa [#allocation3], 0
    %s10 = scalar_lea.sflag [#allocation3], 1
    %11 = vsyncpa %s10, 0
    loop: start=0, step=1, limit=4
    $region2: #{refine_dgf_forward.3} parent=1 // loop_pre_header
      _
    $region3: #{refine_dgf_forward.3} parent=1 // loop_header
      %s13 = sphi 0, %s17
      %p14 = scmp.ge.s32.totalorder %s13, 4
      %s23 = sphi 0, %s25
      %s26 = sphi 0, %s23
      %s27 = sphi 0, %s26
      %s43 = sphi 0, %s27
      %s49 = sphi 0, %s51
      %s52 = sphi 0, %s49
      %s53 = sphi 0, %s52
      %s69 = sphi 0, %s53
      %s73 = sphi 0, %s73
      %s75 = sphi 0, %s73
      %s76 = sphi 0, %s75
      %s90 = sphi 0, %s76
      %s94 = sphi 0, %s94
      %s96 = sphi 0, %s94
      %s97 = sphi 0, %s96
      %s111 = sphi 0, %s97
      %s117 = sphi 0, %s119
      %s120 = sphi 0, %s117
      %s121 = sphi 0, %s120
      %s137 = sphi 0, %s121
    $region4: #{refine_dgf_forward.3} parent=1 // loop_header_branch
      %16 = sbr.rel (%p14) target = $region8
    $region5: #{refine_dgf_forward.3} parent=1 // loop_body
      %s18 = ssub.s32 %s13, 1
      %s19 = ssub.s32 %s13, 2
      %s20 = sadd.s32 %s13, 1
      %s21 = ssub.s32 %s13, %s20
      %p22 = scmp.eq.s32.totalorder %s21, 0
      %s24 = sadd.s32 %s23, 1
      %s25 = scalar_select %p22, %s23, %s24
      %p28 = pneg %p22
      %p29 = scmp.eq.s32.totalorder %s13, 1
      %p30 = por %p28, %p29
      %p31 = scmp.ne.s32.totalorder %s23, %s26
      %p32 = scmp.eq.s32.totalorder %s13, 0
      %p33 = por %p31, %p32
      %p34 = scmp.ne.s32.totalorder %s23, %s26
      %p35 = scmp.eq.s32.totalorder %s18, 1
      %p36 = por %p34, %p35
      %p37 = scmp.ne.s32.totalorder %s26, %s27
      %p38 = scmp.eq.s32.totalorder %s18, 0
      %p39 = por %p37, %p38
      %p40 = scmp.ne.s32.totalorder %s26, %s27
      %p41 = scmp.eq.s32.totalorder %s19, 1
      %p42 = por %p40, %p41
      %p44 = scmp.ne.s32.totalorder %s27, %s43
      %p45 = scmp.eq.s32.totalorder %s19, 0
      %p46 = por %p44, %p45
      %s47 = ssub.s32 %s13, %s20
      %p48 = scmp.eq.s32.totalorder %s47, 0
      %s50 = sadd.s32 %s49, 1
      %s51 = scalar_select %p48, %s49, %s50
      %p54 = pneg %p48
      %p55 = scmp.eq.s32.totalorder %s13, 1
      %p56 = por %p54, %p55
      %p57 = scmp.ne.s32.totalorder %s49, %s52
      %p58 = scmp.eq.s32.totalorder %s13, 0
      %p59 = por %p57, %p58
      %p60 = scmp.ne.s32.totalorder %s49, %s52
      %p61 = scmp.eq.s32.totalorder %s18, 1
      %p62 = por %p60, %p61
      %p63 = scmp.ne.s32.totalorder %s52, %s53
      %p64 = scmp.eq.s32.totalorder %s18, 0
      %p65 = por %p63, %p64
      %p66 = scmp.ne.s32.totalorder %s52, %s53
      %p67 = scmp.eq.s32.totalorder %s19, 1
      %p68 = por %p66, %p67
      %p70 = scmp.ne.s32.totalorder %s53, %s69
      %p71 = scmp.eq.s32.totalorder %s19, 0
      %p72 = por %p70, %p71
      %s74 = sadd.s32 %s73, 1
      %p77 = scmp.eq.s32.totalorder %s13, 1
      %p78 = scmp.ne.s32.totalorder %s73, %s75
      %p79 = scmp.eq.s32.totalorder %s13, 0
      %p80 = por %p78, %p79
      %p81 = scmp.ne.s32.totalorder %s73, %s75
      %p82 = scmp.eq.s32.totalorder %s18, 1
      %p83 = por %p81, %p82
      %p84 = scmp.ne.s32.totalorder %s75, %s76
      %p85 = scmp.eq.s32.totalorder %s18, 0
      %p86 = por %p84, %p85
      %p87 = scmp.ne.s32.totalorder %s75, %s76
      %p88 = scmp.eq.s32.totalorder %s19, 1
      %p89 = por %p87, %p88
      %p91 = scmp.ne.s32.totalorder %s76, %s90
      %p92 = scmp.eq.s32.totalorder %s19, 0
      %p93 = por %p91, %p92
      %s95 = sadd.s32 %s94, 1
      %p98 = scmp.eq.s32.totalorder %s13, 1
      %p99 = scmp.ne.s32.totalorder %s94, %s96
      %p100 = scmp.eq.s32.totalorder %s13, 0
      %p101 = por %p99, %p100
      %p102 = scmp.ne.s32.totalorder %s94, %s96
      %p103 = scmp.eq.s32.totalorder %s18, 1
      %p104 = por %p102, %p103
      %p105 = scmp.ne.s32.totalorder %s96, %s97
      %p106 = scmp.eq.s32.totalorder %s18, 0
      %p107 = por %p105, %p106
      %p108 = scmp.ne.s32.totalorder %s96, %s97
      %p109 = scmp.eq.s32.totalorder %s19, 1
      %p110 = por %p108, %p109
      %p112 = scmp.ne.s32.totalorder %s97, %s111
      %p113 = scmp.eq.s32.totalorder %s19, 0
      %p114 = por %p112, %p113
      %s115 = ssub.s32 %s13, %s20
      %p116 = scmp.eq.s32.totalorder %s115, 0
      %s118 = sadd.s32 %s117, 1
      %s119 = scalar_select %p116, %s117, %s118
      %p122 = pneg %p116
      %p123 = scmp.eq.s32.totalorder %s13, 1
      %p124 = por %p122, %p123
      %p125 = scmp.ne.s32.totalorder %s117, %s120
      %p126 = scmp.eq.s32.totalorder %s13, 0
      %p127 = por %p125, %p126
      %p128 = scmp.ne.s32.totalorder %s117, %s120
      %p129 = scmp.eq.s32.totalorder %s18, 1
      %p130 = por %p128, %p129
      %p131 = scmp.ne.s32.totalorder %s120, %s121
      %p132 = scmp.eq.s32.totalorder %s18, 0
      %p133 = por %p131, %p132
      %p134 = scmp.ne.s32.totalorder %s120, %s121
      %p135 = scmp.eq.s32.totalorder %s19, 1
      %p136 = por %p134, %p135
      %p138 = scmp.ne.s32.totalorder %s121, %s137
      %p139 = scmp.eq.s32.totalorder %s19, 0
      %p140 = por %p138, %p139
      %p141 = scmp.le.s32.totalorder 1, %s13
      %p142 = scmp.lt.s32.totalorder %s13, 3
      %p143 = pnand %p141, %p142
      %p144 = pneg %p143
      // Predicated region
      $region9: #{refine_dgf_forward.3} parent=5 // pred_check
        _
      $region10: #{refine_dgf_forward.3} parent=5 // pred_check_branch
        %146 = sbr.rel (%p143) target = $region12
      $region11: #{refine_dgf_forward.3} parent=5 // pred_region
        %s147 = ssub.s32 %s13, 1
        // Predicated region
        $region13: #{refine_dgf_forward.3} parent=11 // pred_check
          %p148 = pneg %p86
        $region14: #{refine_dgf_forward.3} parent=11 // pred_check_branch
          %150 = sbr.rel (%p148) target = $region16
        $region15: #{refine_dgf_forward.3} parent=11 // pred_region
          _
        $region16: #{refine_dgf_forward.3} parent=11 // pred_fallthru
          _
        // Predicated region
        $region17: #{refine_dgf_forward.3} parent=11 // pred_check
          %p151 = pneg %p107
        $region18: #{refine_dgf_forward.3} parent=11 // pred_check_branch
          %153 = sbr.rel (%p151) target = $region20
        $region19: #{refine_dgf_forward.3} parent=11 // pred_region
          _
        $region20: #{refine_dgf_forward.3} parent=11 // pred_fallthru
          _
      $region12: #{refine_dgf_forward.3} parent=5 // pred_fallthru
        _
      %p154 = scmp.lt.s32.totalorder %s13, 2
      // Predicated region
      $region21: #{refine_dgf_forward.3} parent=5 // pred_check
        %p155 = pneg %p154
      $region22: #{refine_dgf_forward.3} parent=5 // pred_check_branch
        %157 = sbr.rel (%p155) target = $region24
      $region23: #{refine_dgf_forward.3} parent=5 // pred_region
        // Predicated region
        $region25: #{refine_dgf_forward.3} parent=23 // pred_check
          %p158 = pneg %p33
        $region26: #{refine_dgf_forward.3} parent=23 // pred_check_branch
          %160 = sbr.rel (%p158) target = $region28
        $region27: #{refine_dgf_forward.3} parent=23 // pred_region
          %p161 = scmp.lt.s32.totalorder %s13, 1
          %s162 = scalar_select %p161, %s13, 1
          %s163 = smul.addr %s162, 2
          %s164 = smul.addr %s163, 8
          %s165 = scalar_lea.vmem %s0, %s164
        $region28: #{refine_dgf_forward.3} parent=23 // pred_fallthru
          _
        // Predicated region
        $region29: #{refine_dgf_forward.3} parent=23 // pred_check
          %p166 = pneg %p59
        $region30: #{refine_dgf_forward.3} parent=23 // pred_check_branch
          %168 = sbr.rel (%p166) target = $region32
        $region31: #{refine_dgf_forward.3} parent=23 // pred_region
          %p169 = scmp.lt.s32.totalorder %s13, 1
          %s170 = scalar_select %p169, %s13, 1
          %s171 = smul.addr %s170, 8
          %s172 = scalar_lea.vmem %s1, %s171
        $region32: #{refine_dgf_forward.3} parent=23 // pred_fallthru
          _
      $region24: #{refine_dgf_forward.3} parent=5 // pred_fallthru
        _
      %p173 = scmp.le.s32.totalorder 1, %s13
      %p174 = scmp.lt.s32.totalorder %s13, 3
      %p175 = pnand %p173, %p174
      %p176 = pneg %p175
      // Predicated region
      $region33: #{refine_dgf_forward.3} parent=5 // pred_check
        _
      $region34: #{refine_dgf_forward.3} parent=5 // pred_check_branch
        %178 = sbr.rel (%p175) target = $region36
      $region35: #{refine_dgf_forward.3} parent=5 // pred_region
        %s179 = ssub.s32 %s13, 1
        %p180 = scmp.lt.s32.totalorder %s18, 1
        %s181 = scalar_select %p180, %s18, 1
        %s182 = smul.addr %s181, 2
        %s183 = smul.addr %s182, 8
        %s184 = scalar_lea.vmem %s0, %s183
        %p185 = pneg %p39
        %p186 = pneg %p36
        %p187 = scmp.lt.s32.totalorder %s18, 1
        %s188 = scalar_select %p187, %s18, 1
        %s189 = smul.addr %s188, 8
        %s190 = scalar_lea.vmem %s1, %s189
        %p191 = pneg %p65
        %p192 = pneg %p62
        %p193 = pneg %p86
        %p194 = pneg %p83
        %p195 = pneg %p107
        %p196 = pneg %p104
        %p197 = pneg %p133
        %p198 = pneg %p130
        %s199 = sand.u32 %s120, 1
        %s200 = scalar_lea.sflag [#allocation3], %s199
        %s201 = sand.u32 %s120, 1
        %s202 = smul.addr %s201, 16
        %s203 = scalar_lea.vmem [#allocation2], %s202
        %p204 = scmp.lt.s32.totalorder %s18, 1
        %s205 = scalar_select %p204, %s18, 1
        %s206 = smul.addr %s205, 2
        %s207 = smul.addr %s206, 8
        %s208 = scalar_lea.vmem %s0, %s207
        %p209 = scmp.lt.s32.totalorder %s18, 1
        %s210 = scalar_select %p209, %s18, 1
        %s211 = smul.addr %s210, 8
        %s212 = scalar_lea.vmem %s1, %s211
        %v213 = vld [vmem:[%s208] sm:$0xff]
        %v214 = vld [vmem:[%s208 + $0x8] sm:$0xff]
        %v215 = vld [vmem:[%s212] sm:$0xff]
        %v216 = vld [vmem:[%s3] sm:$0xff]
        %vm217 = vcmask 64512
        %v219 = vsel %vm217, %v215, 0
        %221 = vmatprep.subr.mxu0 0.0
        %222 = vmatpush1.msra.mxu0 %v216
        %223 = vmatprep.subr.mxu0 0.0
        %224 = vmatpush1.msra.mxu0 0.0
        %225 = vmatprep.subr.mxu0 0.0
        %226 = vmatpush1.msra.mxu0 0.0
        %227 = vmatprep.subr.mxu0 0.0
        %228 = vmatpush1.msra.mxu0 0.0
        %229 = vmatprep.subr.mxu0 0.0
        %230 = vmatpush1.msra.mxu0 0.0
        %231 = vmatprep.subr.mxu0 0.0
        %232 = vmatpush1.msra.mxu0 0.0
        %233 = vmatprep.subr.mxu0 0.0
        %234 = vmatpush1.msra.mxu0 0.0
        %235 = vmatprep.subr.mxu0 0.0
        %236 = vmatpush1.msra.mxu0 0.0
        %237 = vmatprep.subr.mxu0 0.0
        %238 = vmatpush1.msra.mxu0 0.0
        %239 = vmatprep.subr.mxu0 0.0
        %240 = vmatpush1.msra.mxu0 0.0
        %241 = vmatprep.subr.mxu0 0.0
        %242 = vmatpush1.msra.mxu0 0.0
        %243 = vmatprep.subr.mxu0 0.0
        %244 = vmatpush1.msra.mxu0 0.0
        %245 = vmatprep.subr.mxu0 0.0
        %246 = vmatpush1.msra.mxu0 0.0
        %247 = vmatprep.subr.mxu0 0.0
        %248 = vmatpush1.msra.mxu0 0.0
        %249 = vmatprep.subr.mxu0 0.0
        %250 = vmatpush1.msra.mxu0 0.0
        %251 = vmatprep.subr.mxu0 0.0
        %252 = vmatpush1.msra.mxu0 0.0
        %253 = vmatprep.subr.mxu0 0.0
        %254 = vmatpush1.msra.mxu0 0.0
        %255 = vmatprep.subr.mxu0 0.0
        %256 = vmatpush1.msra.mxu0 0.0
        %257 = vmatprep.subr.mxu0 0.0
        %258 = vmatpush1.msra.mxu0 0.0
        %259 = vmatprep.subr.mxu0 0.0
        %260 = vmatpush1.msra.mxu0 0.0
        %261 = vmatprep.subr.mxu0 0.0
        %262 = vmatpush1.msra.mxu0 0.0
        %263 = vmatprep.subr.mxu0 0.0
        %264 = vmatpush1.msra.mxu0 0.0
        %265 = vmatprep.subr.mxu0 0.0
        %266 = vmatpush1.msra.mxu0 0.0
        %267 = vmatprep.subr.mxu0 0.0
        %268 = vmatpush1.msra.mxu0 0.0
        %269 = vmatprep.subr.mxu0 0.0
        %270 = vmatpush1.msra.mxu0 0.0
        %271 = vmatprep.subr.mxu0 0.0
        %272 = vmatpush1.msra.mxu0 0.0
        %273 = vmatprep.subr.mxu0 0.0
        %274 = vmatpush1.msra.mxu0 0.0
        %275 = vmatprep.subr.mxu0 0.0
        %276 = vmatpush1.msra.mxu0 0.0
        %277 = vmatprep.subr.mxu0 0.0
        %278 = vmatpush1.msra.mxu0 0.0
        %279 = vmatprep.subr.mxu0 0.0
        %280 = vmatpush1.msra.mxu0 0.0
        %281 = vmatprep.subr.mxu0 0.0
        %282 = vmatpush1.msra.mxu0 0.0
        %283 = vmatprep.subr.mxu0 0.0
        %284 = vmatpush1.msra.mxu0 0.0
        %285 = vmatprep.mubr.f32.mxu0 0.0
        %286 = vmatmul.mubr.f32.gmra.mrb[0].mxu0 %v219
        %v287 = vpop.f32.mrb[0].mxu0
        %v288 = vadd.f32 0.0, %v287
        %v289 = vpop.f32.mrb[0].mxu0
        %290 = vdwg.mxu0
        %v291 = vld [vmem:[%s2] sm:$0xff]
        %v292 = vld [vmem:[%s2 + $0x8] sm:$0xff]
        %v294 = vsel %vm217, %v291, 0
        %v297 = vsel %vm217, %v292, 0
        %299 = vmatprep.subr.mxu0 0.0
        %300 = vmatpush1.msra.mxu0 %v288
        %301 = vmatprep.subr.mxu0 0.0
        %302 = vmatpush1.msra.mxu0 0.0
        %303 = vmatprep.subr.mxu0 0.0
        %304 = vmatpush1.msra.mxu0 0.0
        %305 = vmatprep.subr.mxu0 0.0
        %306 = vmatpush1.msra.mxu0 0.0
        %307 = vmatprep.subr.mxu0 0.0
        %308 = vmatpush1.msra.mxu0 0.0
        %309 = vmatprep.subr.mxu0 0.0
        %310 = vmatpush1.msra.mxu0 0.0
        %311 = vmatprep.subr.mxu0 0.0
        %312 = vmatpush1.msra.mxu0 0.0
        %313 = vmatprep.subr.mxu0 0.0
        %314 = vmatpush1.msra.mxu0 0.0
        %315 = vmatprep.subr.mxu0 0.0
        %316 = vmatpush1.msra.mxu0 0.0
        %317 = vmatprep.subr.mxu0 0.0
        %318 = vmatpush1.msra.mxu0 0.0
        %319 = vmatprep.subr.mxu0 0.0
        %320 = vmatpush1.msra.mxu0 0.0
        %321 = vmatprep.subr.mxu0 0.0
        %322 = vmatpush1.msra.mxu0 0.0
        %323 = vmatprep.subr.mxu0 0.0
        %324 = vmatpush1.msra.mxu0 0.0
        %325 = vmatprep.subr.mxu0 0.0
        %326 = vmatpush1.msra.mxu0 0.0
        %327 = vmatprep.subr.mxu0 0.0
        %328 = vmatpush1.msra.mxu0 0.0
        %329 = vmatprep.subr.mxu0 0.0
        %330 = vmatpush1.msra.mxu0 0.0
        %331 = vmatprep.subr.mxu0 0.0
        %332 = vmatpush1.msra.mxu0 0.0
        %333 = vmatprep.subr.mxu0 0.0
        %334 = vmatpush1.msra.mxu0 0.0
        %335 = vmatprep.subr.mxu0 0.0
        %336 = vmatpush1.msra.mxu0 0.0
        %337 = vmatprep.subr.mxu0 0.0
        %338 = vmatpush1.msra.mxu0 0.0
        %339 = vmatprep.subr.mxu0 0.0
        %340 = vmatpush1.msra.mxu0 0.0
        %341 = vmatprep.subr.mxu0 0.0
        %342 = vmatpush1.msra.mxu0 0.0
        %343 = vmatprep.subr.mxu0 0.0
        %344 = vmatpush1.msra.mxu0 0.0
        %345 = vmatprep.subr.mxu0 0.0
        %346 = vmatpush1.msra.mxu0 0.0
        %347 = vmatprep.subr.mxu0 0.0
        %348 = vmatpush1.msra.mxu0 0.0
        %349 = vmatprep.subr.mxu0 0.0
        %350 = vmatpush1.msra.mxu0 0.0
        %351 = vmatprep.subr.mxu0 0.0
        %352 = vmatpush1.msra.mxu0 0.0
        %353 = vmatprep.subr.mxu0 0.0
        %354 = vmatpush1.msra.mxu0 0.0
        %355 = vmatprep.subr.mxu0 0.0
        %356 = vmatpush1.msra.mxu0 0.0
        %357 = vmatprep.subr.mxu0 0.0
        %358 = vmatpush1.msra.mxu0 0.0
        %359 = vmatprep.subr.mxu0 0.0
        %360 = vmatpush1.msra.mxu0 0.0
        %361 = vmatprep.subr.mxu0 0.0
        %362 = vmatpush1.msra.mxu0 0.0
        %363 = vmatprep.mubr.f32.mxu0 0.0
        %364 = vmatmul.mubr.f32.gmra.mrb[0].mxu0 %v294
        %v365 = vpop.f32.mrb[0].mxu0
        %v366 = vadd.f32 0.0, %v365
        %v367 = vpop.f32.mrb[0].mxu0
        %368 = vmatprep.mubr.f32.mxu0 0.0
        %369 = vmatmul.mubr.f32.gmra.mrb[0].mxu0 %v297
        %v370 = vpop.f32.mrb[0].mxu0
        %v371 = vadd.f32 0.0, %v370
        %v372 = vpop.f32.mrb[0].mxu0
        %373 = vdwg.mxu0
        %v374 = vlaneseq
        %v375 = vshrl.u32 %v374, 7
        %v376 = vadd.s32 %v375, 8
        %v377 = vlaneseq
        %v378 = vand.u32 %v377, 127
        %vm379 = vcmp.ge.s32.totalorder %v375, 1
        %vm380 = vcmp.ge.s32.totalorder %v376, 1
        %vm381 = vcmp.lt.s32.totalorder %v375, 1
        %v382 = vsel %vm379, 1.0, 0.0
        %v383 = vsel %vm380, 1.0, 0.0
        %vm384 = vcmp.le.s32.totalorder %v375, 14
        %vm385 = vcmp.le.s32.totalorder %v376, 14
        %vm386 = vcmp.lt.s32.totalorder %v375, 7
        %v387 = vsel %vm384, 1.0, 0.0
        %v388 = vsel %vm385, 1.0, 0.0
        %v389 = vadd.f32 %v382, 1.0
        %v390 = vadd.f32 %v383, 1.0
        %v391 = vadd.f32 %v389, %v387
        %v392 = vadd.f32 %v390, %v388
        %vm393 = vcmp.ge.s32.totalorder %v378, 1
        %vm394 = vcmask 1047680
        %395 = vrot.lane.b32.xlu0 %v391, 16
        %v396 = vpop.permute.xlu0 %395
        %v397 = vsel %vm394, %v396, %v391
        %398 = vrot.lane.b32.xlu0 %v392, 16
        %v399 = vpop.permute.xlu0 %398
        %v400 = vsel %vm394, %v399, %v392
        %401 = vrot.lane.b32.xlu0 %v397, 16
        %v402 = vpop.permute.xlu0 %401
        %403 = vrot.lane.b32.xlu0 %v400, 16
        %v404 = vpop.permute.xlu0 %403
        %v405 = vsel %vm394, %v402, %v391
        %v406 = vsel %vm394, %v404, %v392
        %409 = vrot.lane.b32.xlu0 %v405, 113
        %v410 = vpop.permute.xlu0 %409
        %411 = vrot.lane.b32.xlu0 %v406, 113
        %v412 = vpop.permute.xlu0 %411
        %v415 = vsel %vm393, %v410, 0.0
        %v416 = vsel %vm393, %v412, 0.0
        %vm417 = vcmp.le.s32.totalorder %v378, 14
        %418 = vrot.lane.b32.xlu0 %v405, 127
        %v419 = vpop.permute.xlu0 %418
        %420 = vrot.lane.b32.xlu0 %v406, 127
        %v421 = vpop.permute.xlu0 %420
        %v424 = vsel %vm417, %v419, 0.0
        %v425 = vsel %vm417, %v421, 0.0
        %v426 = vadd.f32 %v391, %v415
        %v427 = vadd.f32 %v392, %v416
        %v428 = vadd.f32 %v426, %v424
        %v429 = vadd.f32 %v427, %v425
        %v430 = vrcp.pop %v428
        %v431 = vmul.f32 1.0, %v430
        %v432 = vrcp.pop %v429
        %v433 = vmul.f32 1.0, %v432
        %v434 = vrot.slane %v213, 7
        %v435 = vrot.slane %v214, 7
        %v436 = vsel %vm381, %v434, %v435
        %v437 = vsel %vm381, %v435, %v434
        %v438 = vsel %vm379, %v437, 0.0
        %v439 = vsel %vm380, %v436, 0.0
        %v440 = vrot.slane %v213, 1
        %v441 = vrot.slane %v214, 1
        %v442 = vsel %vm386, %v440, %v441
        %v443 = vsel %vm386, %v441, %v440
        %v444 = vsel %vm384, %v442, 0.0
        %v445 = vsel %vm385, %v443, 0.0
        %v446 = vadd.f32 %v213, %v438
        %v447 = vadd.f32 %v214, %v439
        %v448 = vadd.f32 %v446, %v444
        %v449 = vadd.f32 %v447, %v445
        %450 = vrot.lane.b32.xlu0 %v448, 16
        %v451 = vpop.permute.xlu0 %450
        %v452 = vsel %vm394, %v451, %v448
        %453 = vrot.lane.b32.xlu0 %v449, 16
        %v454 = vpop.permute.xlu0 %453
        %v455 = vsel %vm394, %v454, %v449
        %456 = vrot.lane.b32.xlu0 %v452, 16
        %v457 = vpop.permute.xlu0 %456
        %458 = vrot.lane.b32.xlu0 %v455, 16
        %v459 = vpop.permute.xlu0 %458
        %v460 = vsel %vm394, %v457, %v448
        %v461 = vsel %vm394, %v459, %v449
        %464 = vrot.lane.b32.xlu0 %v460, 113
        %v465 = vpop.permute.xlu0 %464
        %466 = vrot.lane.b32.xlu0 %v461, 113
        %v467 = vpop.permute.xlu0 %466
        %v470 = vsel %vm393, %v465, 0.0
        %v471 = vsel %vm393, %v467, 0.0
        %472 = vrot.lane.b32.xlu0 %v460, 127
        %v473 = vpop.permute.xlu0 %472
        %474 = vrot.lane.b32.xlu0 %v461, 127
        %v475 = vpop.permute.xlu0 %474
        %v478 = vsel %vm417, %v473, 0.0
        %v479 = vsel %vm417, %v475, 0.0
        %v480 = vadd.f32 %v448, %v470
        %v481 = vadd.f32 %v449, %v471
        %v482 = vadd.f32 %v480, %v478
        %v483 = vadd.f32 %v481, %v479
        %v484 = vmul.f32 %v482, %v431
        %v485 = vmul.f32 %v483, %v433
        %v486 = vrot.slane %v366, 7
        %v487 = vrot.slane %v371, 7
        %v488 = vsel %vm381, %v486, %v487
        %v489 = vsel %vm381, %v487, %v486
        %v490 = vsel %vm379, %v489, 0.0
        %v491 = vsel %vm380, %v488, 0.0
        %v492 = vrot.slane %v366, 1
        %v493 = vrot.slane %v371, 1
        %v494 = vsel %vm386, %v492, %v493
        %v495 = vsel %vm386, %v493, %v492
        %v496 = vsel %vm384, %v494, 0.0
        %v497 = vsel %vm385, %v495, 0.0
        %v498 = vadd.f32 %v366, %v490
        %v499 = vadd.f32 %v371, %v491
        %v500 = vadd.f32 %v498, %v496
        %v501 = vadd.f32 %v499, %v497
        %502 = vrot.lane.b32.xlu0 %v500, 16
        %v503 = vpop.permute.xlu0 %502
        %v504 = vsel %vm394, %v503, %v500
        %505 = vrot.lane.b32.xlu0 %v501, 16
        %v506 = vpop.permute.xlu0 %505
        %v507 = vsel %vm394, %v506, %v501
        %508 = vrot.lane.b32.xlu0 %v504, 16
        %v509 = vpop.permute.xlu0 %508
        %510 = vrot.lane.b32.xlu0 %v507, 16
        %v511 = vpop.permute.xlu0 %510
        %v512 = vsel %vm394, %v509, %v500
        %v513 = vsel %vm394, %v511, %v501
        %516 = vrot.lane.b32.xlu0 %v512, 113
        %v517 = vpop.permute.xlu0 %516
        %518 = vrot.lane.b32.xlu0 %v513, 113
        %v519 = vpop.permute.xlu0 %518
        %v522 = vsel %vm393, %v517, 0.0
        %v523 = vsel %vm393, %v519, 0.0
        %524 = vrot.lane.b32.xlu0 %v512, 127
        %v525 = vpop.permute.xlu0 %524
        %526 = vrot.lane.b32.xlu0 %v513, 127
        %v527 = vpop.permute.xlu0 %526
        %v530 = vsel %vm417, %v525, 0.0
        %v531 = vsel %vm417, %v527, 0.0
        %v532 = vadd.f32 %v500, %v522
        %v533 = vadd.f32 %v501, %v523
        %v534 = vadd.f32 %v532, %v530
        %v535 = vadd.f32 %v533, %v531
        %v536 = vmul.f32 %v534, %v431
        %v537 = vmul.f32 %v535, %v433
        %v538 = vmul.f32 %v213, %v366
        %v539 = vmul.f32 %v214, %v371
        %v540 = vrot.slane %v538, 7
        %v541 = vrot.slane %v539, 7
        %v542 = vsel %vm381, %v540, %v541
        %v543 = vsel %vm381, %v541, %v540
        %v544 = vsel %vm379, %v543, 0.0
        %v545 = vsel %vm380, %v542, 0.0
        %v546 = vrot.slane %v538, 1
        %v547 = vrot.slane %v539, 1
        %v548 = vsel %vm386, %v546, %v547
        %v549 = vsel %vm386, %v547, %v546
        %v550 = vsel %vm384, %v548, 0.0
        %v551 = vsel %vm385, %v549, 0.0
        %v552 = vadd.f32 %v538, %v544
        %v553 = vadd.f32 %v539, %v545
        %v554 = vadd.f32 %v552, %v550
        %v555 = vadd.f32 %v553, %v551
        %556 = vrot.lane.b32.xlu0 %v554, 16
        %v557 = vpop.permute.xlu0 %556
        %v558 = vsel %vm394, %v557, %v554
        %559 = vrot.lane.b32.xlu0 %v555, 16
        %v560 = vpop.permute.xlu0 %559
        %v561 = vsel %vm394, %v560, %v555
        %562 = vrot.lane.b32.xlu0 %v558, 16
        %v563 = vpop.permute.xlu0 %562
        %564 = vrot.lane.b32.xlu0 %v561, 16
        %v565 = vpop.permute.xlu0 %564
        %v566 = vsel %vm394, %v563, %v554
        %v567 = vsel %vm394, %v565, %v555
        %570 = vrot.lane.b32.xlu0 %v566, 113
        %v571 = vpop.permute.xlu0 %570
        %572 = vrot.lane.b32.xlu0 %v567, 113
        %v573 = vpop.permute.xlu0 %572
        %v576 = vsel %vm393, %v571, 0.0
        %v577 = vsel %vm393, %v573, 0.0
        %578 = vrot.lane.b32.xlu0 %v566, 127
        %v579 = vpop.permute.xlu0 %578
        %580 = vrot.lane.b32.xlu0 %v567, 127
        %v581 = vpop.permute.xlu0 %580
        %v584 = vsel %vm417, %v579, 0.0
        %v585 = vsel %vm417, %v581, 0.0
        %v586 = vadd.f32 %v554, %v576
        %v587 = vadd.f32 %v555, %v577
        %v588 = vadd.f32 %v586, %v584
        %v589 = vadd.f32 %v587, %v585
        %v590 = vmul.f32 %v588, %v431
        %v591 = vmul.f32 %v589, %v433
        %v592 = vmul.f32 %v484, %v536
        %v593 = vmul.f32 %v485, %v537
        %v594 = vsub.f32 %v590, %v592
        %v595 = vsub.f32 %v591, %v593
        %v596 = vmul.f32 %v213, %v213
        %v597 = vmul.f32 %v214, %v214
        %v598 = vrot.slane %v596, 7
        %v599 = vrot.slane %v597, 7
        %v600 = vsel %vm381, %v598, %v599
        %v601 = vsel %vm381, %v599, %v598
        %v602 = vsel %vm379, %v601, 0.0
        %v603 = vsel %vm380, %v600, 0.0
        %v604 = vrot.slane %v596, 1
        %v605 = vrot.slane %v597, 1
        %v606 = vsel %vm386, %v604, %v605
        %v607 = vsel %vm386, %v605, %v604
        %v608 = vsel %vm384, %v606, 0.0
        %v609 = vsel %vm385, %v607, 0.0
        %v610 = vadd.f32 %v596, %v602
        %v611 = vadd.f32 %v597, %v603
        %v612 = vadd.f32 %v610, %v608
        %v613 = vadd.f32 %v611, %v609
        %614 = vrot.lane.b32.xlu0 %v612, 16
        %v615 = vpop.permute.xlu0 %614
        %v616 = vsel %vm394, %v615, %v612
        %617 = vrot.lane.b32.xlu0 %v613, 16
        %v618 = vpop.permute.xlu0 %617
        %v619 = vsel %vm394, %v618, %v613
        %620 = vrot.lane.b32.xlu0 %v616, 16
        %v621 = vpop.permute.xlu0 %620
        %622 = vrot.lane.b32.xlu0 %v619, 16
        %v623 = vpop.permute.xlu0 %622
        %v624 = vsel %vm394, %v621, %v612
        %v625 = vsel %vm394, %v623, %v613
        %628 = vrot.lane.b32.xlu0 %v624, 113
        %v629 = vpop.permute.xlu0 %628
        %630 = vrot.lane.b32.xlu0 %v625, 113
        %v631 = vpop.permute.xlu0 %630
        %v634 = vsel %vm393, %v629, 0.0
        %v635 = vsel %vm393, %v631, 0.0
        %636 = vrot.lane.b32.xlu0 %v624, 127
        %v637 = vpop.permute.xlu0 %636
        %638 = vrot.lane.b32.xlu0 %v625, 127
        %v639 = vpop.permute.xlu0 %638
        %v642 = vsel %vm417, %v637, 0.0
        %v643 = vsel %vm417, %v639, 0.0
        %v644 = vadd.f32 %v612, %v634
        %v645 = vadd.f32 %v613, %v635
        %v646 = vadd.f32 %v644, %v642
        %v647 = vadd.f32 %v645, %v643
        %v648 = vmul.f32 %v646, %v431
        %v649 = vmul.f32 %v647, %v433
        %v650 = vmul.f32 %v484, %v484
        %v651 = vmul.f32 %v485, %v485
        %v652 = vsub.f32 %v648, %v650
        %v653 = vsub.f32 %v649, %v651
        %v654 = vadd.f32 %v652, 1e-08
        %v655 = vadd.f32 %v653, 1e-08
        %v656 = vrcp.pop %v654
        %v657 = vmul.f32 %v594, %v656
        %v658 = vrcp.pop %v655
        %v659 = vmul.f32 %v595, %v658
        %v660 = vmul.f32 %v657, %v484
        %v661 = vmul.f32 %v659, %v485
        %v662 = vsub.f32 %v536, %v660
        %v663 = vsub.f32 %v537, %v661
        %v664 = vrot.slane %v657, 7
        %v665 = vrot.slane %v659, 7
        %v666 = vsel %vm381, %v664, %v665
        %v667 = vsel %vm381, %v665, %v664
        %v668 = vsel %vm379, %v667, 0.0
        %v669 = vsel %vm380, %v666, 0.0
        %v670 = vrot.slane %v657, 1
        %v671 = vrot.slane %v659, 1
        %v672 = vsel %vm386, %v670, %v671
        %v673 = vsel %vm386, %v671, %v670
        %v674 = vsel %vm384, %v672, 0.0
        %v675 = vsel %vm385, %v673, 0.0
        %v676 = vadd.f32 %v657, %v668
        %v677 = vadd.f32 %v659, %v669
        %v678 = vadd.f32 %v676, %v674
        %v679 = vadd.f32 %v677, %v675
        %680 = vrot.lane.b32.xlu0 %v678, 16
        %v681 = vpop.permute.xlu0 %680
        %v682 = vsel %vm394, %v681, %v678
        %683 = vrot.lane.b32.xlu0 %v679, 16
        %v684 = vpop.permute.xlu0 %683
        %v685 = vsel %vm394, %v684, %v679
        %686 = vrot.lane.b32.xlu0 %v682, 16
        %v687 = vpop.permute.xlu0 %686
        %688 = vrot.lane.b32.xlu0 %v685, 16
        %v689 = vpop.permute.xlu0 %688
        %v690 = vsel %vm394, %v687, %v678
        %v691 = vsel %vm394, %v689, %v679
        %694 = vrot.lane.b32.xlu0 %v690, 113
        %v695 = vpop.permute.xlu0 %694
        %696 = vrot.lane.b32.xlu0 %v691, 113
        %v697 = vpop.permute.xlu0 %696
        %v700 = vsel %vm393, %v695, 0.0
        %v701 = vsel %vm393, %v697, 0.0
        %702 = vrot.lane.b32.xlu0 %v690, 127
        %v703 = vpop.permute.xlu0 %702
        %704 = vrot.lane.b32.xlu0 %v691, 127
        %v705 = vpop.permute.xlu0 %704
        %v708 = vsel %vm417, %v703, 0.0
        %v709 = vsel %vm417, %v705, 0.0
        %v710 = vadd.f32 %v678, %v700
        %v711 = vadd.f32 %v679, %v701
        %v712 = vadd.f32 %v710, %v708
        %v713 = vadd.f32 %v711, %v709
        %v714 = vmul.f32 %v712, %v431
        %v715 = vmul.f32 %v713, %v433
        %v716 = vrot.slane %v662, 7
        %v717 = vrot.slane %v663, 7
        %v718 = vsel %vm381, %v716, %v717
        %v719 = vsel %vm381, %v717, %v716
        %v720 = vsel %vm379, %v719, 0.0
        %v721 = vsel %vm380, %v718, 0.0
        %v722 = vrot.slane %v662, 1
        %v723 = vrot.slane %v663, 1
        %v724 = vsel %vm386, %v722, %v723
        %v725 = vsel %vm386, %v723, %v722
        %v726 = vsel %vm384, %v724, 0.0
        %v727 = vsel %vm385, %v725, 0.0
        %v728 = vadd.f32 %v662, %v720
        %v729 = vadd.f32 %v663, %v721
        %v730 = vadd.f32 %v728, %v726
        %v731 = vadd.f32 %v729, %v727
        %732 = vrot.lane.b32.xlu0 %v730, 16
        %v733 = vpop.permute.xlu0 %732
        %v734 = vsel %vm394, %v733, %v730
        %735 = vrot.lane.b32.xlu0 %v731, 16
        %v736 = vpop.permute.xlu0 %735
        %v737 = vsel %vm394, %v736, %v731
        %738 = vrot.lane.b32.xlu0 %v734, 16
        %v739 = vpop.permute.xlu0 %738
        %740 = vrot.lane.b32.xlu0 %v737, 16
        %v741 = vpop.permute.xlu0 %740
        %v742 = vsel %vm394, %v739, %v730
        %v743 = vsel %vm394, %v741, %v731
        %746 = vrot.lane.b32.xlu0 %v742, 113
        %v747 = vpop.permute.xlu0 %746
        %748 = vrot.lane.b32.xlu0 %v743, 113
        %v749 = vpop.permute.xlu0 %748
        %v752 = vsel %vm393, %v747, 0.0
        %v753 = vsel %vm393, %v749, 0.0
        %754 = vrot.lane.b32.xlu0 %v742, 127
        %v755 = vpop.permute.xlu0 %754
        %756 = vrot.lane.b32.xlu0 %v743, 127
        %v757 = vpop.permute.xlu0 %756
        %v760 = vsel %vm417, %v755, 0.0
        %v761 = vsel %vm417, %v757, 0.0
        %v762 = vadd.f32 %v730, %v752
        %v763 = vadd.f32 %v731, %v753
        %v764 = vadd.f32 %v762, %v760
        %v765 = vadd.f32 %v763, %v761
        %v766 = vmul.f32 %v764, %v431
        %v767 = vmul.f32 %v765, %v433
        %v768 = vmul.f32 %v714, %v213
        %v769 = vmul.f32 %v715, %v214
        %v770 = vadd.f32 %v768, %v766
        %v771 = vadd.f32 %v769, %v767
        %vm772 = vcmask 130048
        %773 = vst.msk [vmem:[%s203] sm:$0xff] %vm772, %v770
        %774 = vst.msk [vmem:[%s203 + $0x8] sm:$0xff] %vm772, %v771
        %s775 = sand.u32 %s120, 1
        %s776 = scalar_lea.sflag [#allocation3], %s775
        %s777 = sand.u32 %s120, 1
        %s778 = smul.addr %s777, 16
        %s779 = scalar_lea.vmem [#allocation2], %s778
        // Predicated region
        $region37: #{refine_dgf_forward.3} parent=35 // pred_check
          %p780 = pneg %p130
        $region38: #{refine_dgf_forward.3} parent=35 // pred_check_branch
          %782 = sbr.rel (%p780) target = $region40
        $region39: #{refine_dgf_forward.3} parent=35 // pred_region
          %s784 = ssub.s32 256, 256
          %785 = vsyncadd %s776, %s784
          %s786 = smul.addr %s18, 2
          %s787 = smul.addr %s786, 128
          %s788 = scalar_lea.hbm %s4, %s787
          %s789 = sshll.u32 %s779, 4
          %s790 = int_to_ptr.vmem [resolvable:$true] %s789
          %795 = dma.vmem_to_hbm [thread:$0]  %s790, 256, %s788, %s776, 128, 128, 8
        $region40: #{refine_dgf_forward.3} parent=35 // pred_fallthru
          _
      $region36: #{refine_dgf_forward.3} parent=5 // pred_fallthru
        _
      %p796 = scmp.le.s32.totalorder 2, %s13
      // Predicated region
      $region41: #{refine_dgf_forward.3} parent=5 // pred_check
        %p797 = pneg %p796
      $region42: #{refine_dgf_forward.3} parent=5 // pred_check_branch
        %799 = sbr.rel (%p797) target = $region44
      $region43: #{refine_dgf_forward.3} parent=5 // pred_region
        %s800 = ssub.s32 %s13, 2
        // Predicated region
        $region45: #{refine_dgf_forward.3} parent=43 // pred_check
          %p801 = pneg %p136
        $region46: #{refine_dgf_forward.3} parent=43 // pred_check_branch
          %803 = sbr.rel (%p801) target = $region48
        $region47: #{refine_dgf_forward.3} parent=43 // pred_region
          %s804 = sand.u32 %s121, 1
          %s805 = scalar_lea.sflag [#allocation3], %s804
          %s806 = sand.u32 %s121, 1
          %s807 = smul.addr %s806, 16
          %s808 = scalar_lea.vmem [#allocation2], %s807
          %809 = dma.done %s805, 256
        $region48: #{refine_dgf_forward.3} parent=43 // pred_fallthru
          _
      $region44: #{refine_dgf_forward.3} parent=5 // pred_fallthru
        _
    $region6: #{refine_dgf_forward.3} parent=1 // loop_footer
      %s17 = sadd.s32 1, %s13
    $region7: #{refine_dgf_forward.3} parent=1 // loop_footer_branch
      %12 = sbr.rel target = $region3
    $region8: #{refine_dgf_forward.3} parent=1 // loop_exit
      _
    %810 = vsyncpa [#allocation3], 1
    %s811 = scalar_lea.sflag [#allocation3], 1
    %812 = vsyncpa %s811, 1

</llo_original>
